<compile_context>
chip_gen: v5e
topology: v5e:2x2
jax: 0.10.0
libtpu: 0.0.40
codegen_flags: <defaults>
</compile_context>

<pallas_src>
import jax
import jax.numpy as jnp
from jax.experimental import pallas as pl
from jax.experimental.pallas import tpu as pltpu


TILE = 128          # node tile: rows and reduction columns of A_hat
PAD_C = 128         # class dim padded to one full lane group (dense vst)
NEG = -1e30         # mask value for padded class lanes (exp underflows to 0)


# ---------------------------------------------------------------------------
# layer 1:  h1 = relu((A @ X) @ W1 + b1)          (dropout = identity, eval)
# ---------------------------------------------------------------------------
def _gcn_layer1_kernel(a_ref, x_ref, w1_ref, b1_ref, h1_ref, acc_ref):
    k = pl.program_id(1)

    @pl.when(k == 0)
    def _():
        acc_ref[...] = jnp.zeros_like(acc_ref)

    # Aggregate neighbours first: the N^2-scaling matmul contracts against the
    # narrow (F_in-wide) raw-feature block instead of the H-wide one.
    acc_ref[...] += jnp.dot(a_ref[...], x_ref[...],
                            preferred_element_type=jnp.float32)

    @pl.when(k == pl.num_programs(1) - 1)
    def _():
        h = jnp.dot(acc_ref[...].astype(jnp.bfloat16), w1_ref[...],
                    preferred_element_type=jnp.float32)
        h = jnp.maximum(h + b1_ref[...], 0.0)        # bias + ReLU in f32
        h1_ref[...] = h.astype(h1_ref.dtype)


# ---------------------------------------------------------------------------
# layer 2 + softmax:  out = softmax((A @ h1) @ W2p + b2p)   (padded classes)
# ---------------------------------------------------------------------------
def _gcn_layer2_kernel(a_ref, h1_ref, w2_ref, b2_ref, out_ref, acc_ref):
    k = pl.program_id(1)

    @pl.when(k == 0)
    def _():
        acc_ref[...] = jnp.zeros_like(acc_ref)

    acc_ref[...] += jnp.dot(a_ref[...], h1_ref[...],
                            preferred_element_type=jnp.float32)

    @pl.when(k == pl.num_programs(1) - 1)
    def _():
        logits = jnp.dot(acc_ref[...].astype(jnp.bfloat16), w2_ref[...],
                         preferred_element_type=jnp.float32) + b2_ref[...]
        m = jnp.max(logits, axis=-1, keepdims=True)
        e = jnp.exp(logits - m)                      # pad lanes -> exp(-huge)=0
        denom = jnp.sum(e, axis=-1, keepdims=True)
        out_ref[...] = e * pl.reciprocal(denom, approx=True)


def _round_up(v, m):
    return ((v + m - 1) // m) * m


def gcn_forward(a_norm, x, w1, b1, w2, b2, *, tile=TILE):
    """Fused 2-layer GCN forward (eval mode). Returns (N, num_classes) f32."""
    n, f_in = x.shape
    hidden = w1.shape[1]
    c_out = w2.shape[1]
    n_pad = _round_up(n, tile)
    grid = (n_pad // tile, n_pad // tile)

    # bf16 matmul operands (halves HBM traffic; MXU is bf16-native).
    a_p = jnp.zeros((n_pad, n_pad), jnp.bfloat16).at[:n, :n].set(
        a_norm.astype(jnp.bfloat16))
    x_p = jnp.zeros((n_pad, f_in), jnp.bfloat16).at[:n, :].set(
        x.astype(jnp.bfloat16))
    w1_b = w1.astype(jnp.bfloat16)
    b1_f = b1.astype(jnp.float32).reshape(1, hidden)
    # Pad the class dim to a full 128-lane group; mask pad lanes via the bias.
    w2_p = jnp.zeros((hidden, PAD_C), jnp.bfloat16).at[:, :c_out].set(
        w2.astype(jnp.bfloat16))
    b2_p = jnp.full((1, PAD_C), NEG, jnp.float32).at[:, :c_out].set(
        b2.astype(jnp.float32).reshape(1, c_out))

    # Explicit scoped-VMEM budget: double-buffered blocks + accumulator,
    # clamped well below every generation's (16/32 MiB default) limit.
    blk_bytes = 2 * (tile * tile * 2                       # A block (bf16)
                     + tile * max(f_in, hidden) * 2        # X / h1 block
                     + tile * max(hidden, PAD_C) * 4)      # output block
    vmem_limit = min(max(blk_bytes + (8 << 20), 16 << 20), 32 << 20)

    cparams = pltpu.CompilerParams(
        dimension_semantics=("parallel", "arbitrary"),
        vmem_limit_bytes=vmem_limit,
    )

    h1 = pl.pallas_call(
        _gcn_layer1_kernel,
        out_shape=jax.ShapeDtypeStruct((n_pad, hidden), jnp.bfloat16),
        grid_spec=pltpu.PrefetchScalarGridSpec(
            num_scalar_prefetch=0,
            grid=grid,
            in_specs=[
                pl.BlockSpec((tile, tile), lambda i, k: (i, k)),    # A_hat
                pl.BlockSpec((tile, f_in), lambda i, k: (k, 0)),    # X
                pl.BlockSpec((f_in, hidden), lambda i, k: (0, 0)),  # W1
                pl.BlockSpec((1, hidden), lambda i, k: (0, 0)),     # b1
            ],
            out_specs=pl.BlockSpec((tile, hidden), lambda i, k: (i, 0)),
            scratch_shapes=[pltpu.VMEM((tile, f_in), jnp.float32)],
        ),
        compiler_params=cparams,
    )(a_p, x_p, w1_b, b1_f)

    out_pad = pl.pallas_call(
        _gcn_layer2_kernel,
        out_shape=jax.ShapeDtypeStruct((n_pad, PAD_C), jnp.float32),
        grid_spec=pltpu.PrefetchScalarGridSpec(
            num_scalar_prefetch=0,
            grid=grid,
            in_specs=[
                pl.BlockSpec((tile, tile), lambda i, k: (i, k)),     # A_hat
                pl.BlockSpec((tile, hidden), lambda i, k: (k, 0)),   # h1
                pl.BlockSpec((hidden, PAD_C), lambda i, k: (0, 0)),  # W2 padded
                pl.BlockSpec((1, PAD_C), lambda i, k: (0, 0)),       # b2 padded
            ],
            out_specs=pl.BlockSpec((tile, PAD_C), lambda i, k: (i, 0)),
            scratch_shapes=[pltpu.VMEM((tile, hidden), jnp.float32)],
        ),
        compiler_params=cparams,
    )(a_p, h1, w2_p, b2_p)

    # lane-dense padded store inside the kernel; slice real rows/classes here.
    return out_pad[:n, :c_out]


def normalized_adjacency(edge_index, num_nodes):
    """Dense D^-1/2 (A + I) D^-1/2 as in PyG GCNConv (add_self_loops=True)."""
    src, dst = edge_index[0], edge_index[1]
    a = jnp.zeros((num_nodes, num_nodes), jnp.float32)
    a = a.at[dst, src].add(1.0)               # message flows src -> dst
    a = a + jnp.eye(num_nodes, dtype=jnp.float32)
    deg = jnp.sum(a, axis=1)
    dinv = jnp.where(deg > 0, 1.0 / jnp.sqrt(deg), 0.0)
    return dinv[:, None] * a * dinv[None, :]


if __name__ == "__main__":
    key = jax.random.PRNGKey(0)
    k_x, k_e, k_w1, k_w2 = jax.random.split(key, 4)

    num_nodes = 200
    num_node_features = 8
    hidden = 32
    num_classes = 2
    num_und_edges = 400

    # deterministic node features
    x = jax.random.normal(k_x, (num_nodes, num_node_features), jnp.float32)

    # deterministic random undirected edge set
    e_src = jax.random.randint(k_e, (num_und_edges,), 0, num_nodes)
    e_dst = jnp.roll(e_src, 7)  # arbitrary but deterministic pairing
    edge_index = jnp.stack(
        [jnp.concatenate([e_src, e_dst]), jnp.concatenate([e_dst, e_src])], axis=0
    )
    a_norm = normalized_adjacency(edge_index, num_nodes)

    # deterministic Glorot-like parameter init (matches GCNConv param shapes)
    def glorot(k, shape):
        fan_in, fan_out = shape
        std = (2.0 / (fan_in + fan_out)) ** 0.5
        return std * jax.random.normal(k, shape, jnp.float32)

    w1 = glorot(k_w1, (num_node_features, hidden))
    b1 = jnp.zeros((1, hidden), jnp.float32)
    w2 = glorot(k_w2, (hidden, num_classes))
    b2 = jnp.zeros((1, num_classes), jnp.float32)

    out = jax.jit(gcn_forward)(a_norm, x, w1, b1, w2, b2)
    out = jax.block_until_ready(out)

    # sanity: shape + softmax rows sum to 1 (approx reciprocal tolerance)
    assert out.shape == (num_nodes, num_classes)
    assert jnp.allclose(jnp.sum(out, axis=-1), 1.0, atol=5e-3)

    # pure-JAX f32 reference check (bf16 matmuls -> loose tolerance)
    h_ref = jnp.maximum(a_norm @ (x @ w1) + b1, 0.0)
    logits_ref = a_norm @ (h_ref @ w2) + b2
    ref = jax.nn.softmax(logits_ref, axis=-1)
    assert jnp.allclose(out, ref, atol=5e-2)

    print("KERNEL_OK")
</pallas_src>

<mosaic_0001>
module attributes {stable_mosaic.version = 11 : i64} {
  func.func @_gcn_layer1_kernel(%arg0: i32, %arg1: i32, %arg2: memref<128x128xbf16, #tpu.memory_space<vmem>>, %arg3: memref<128x8xbf16, #tpu.memory_space<vmem>>, %arg4: memref<8x32xbf16, #tpu.memory_space<vmem>>, %arg5: memref<1x32xf32, #tpu.memory_space<vmem>>, %arg6: memref<128x32xbf16, #tpu.memory_space<vmem>>, %arg7: memref<128x8xf32, #tpu.memory_space<vmem>>) attributes {dimension_semantics = [#tpu.dimension_semantics<parallel>, #tpu.dimension_semantics<arbitrary>], iteration_bounds = array<i64: 2, 2>, scalar_prefetch = 0 : i64, scratch_operands = 1 : i64, tpu.core_type = #tpu.core_type<tc>, window_params = [{transform_indices = @transform_0, window_bounds = array<i64: 128, 128>}, {transform_indices = @transform_1, window_bounds = array<i64: 128, 8>}, {pipeline_mode = #tpu.pipeline_mode<synchronous>, transform_indices = @transform_2, window_bounds = array<i64: 8, 32>}, {pipeline_mode = #tpu.pipeline_mode<synchronous>, transform_indices = @transform_3, window_bounds = array<i64: 1, 32>}, {transform_indices = @transform_4, window_bounds = array<i64: 128, 32>}]} {
    %c0_i32 = arith.constant 0 : i32
    %0 = arith.cmpi eq, %arg1, %c0_i32 : i32
    %1 = arith.extui %0 : i1 to i32
    %c0_i32_0 = arith.constant 0 : i32
    %2 = arith.cmpi ne, %1, %c0_i32_0 : i32
    scf.if %2 {
      %cst_9 = arith.constant 0.000000e+00 : f32
      %12 = vector.broadcast %cst_9 : f32 to vector<128x8xf32>
      %c0_10 = arith.constant 0 : index
      %c0_11 = arith.constant 0 : index
      %13 = vector.load %arg7[%c0_10, %c0_11] : memref<128x8xf32, #tpu.memory_space<vmem>>, vector<128x8xf32>
      tpu.vector_store %arg7[%c0_10, %c0_11], %12 {strides = array<i32>} : memref<128x8xf32, #tpu.memory_space<vmem>>, vector<128x8xf32>,
    } else {
    }
    %c0 = arith.constant 0 : index
    %c0_1 = arith.constant 0 : index
    %3 = vector.load %arg7[%c0, %c0_1] : memref<128x8xf32, #tpu.memory_space<vmem>>, vector<128x8xf32>
    %c0_2 = arith.constant 0 : index
    %c0_3 = arith.constant 0 : index
    %4 = vector.load %arg2[%c0_2, %c0_3] : memref<128x128xbf16, #tpu.memory_space<vmem>>, vector<128x128xbf16>
    %c0_4 = arith.constant 0 : index
    %c0_5 = arith.constant 0 : index
    %5 = vector.load %arg3[%c0_4, %c0_5] : memref<128x8xbf16, #tpu.memory_space<vmem>>, vector<128x8xbf16>
    %cst = arith.constant dense<0.000000e+00> : vector<128x8xf32>
    %6 = tpu.matmul %4, %5, %cst {dimension_numbers = #tpu.dot_dimension_numbers<[1], [0], [0], [1], [0, 0, 1, 1], [], []>} : vector<128x128xbf16>, vector<128x8xbf16>, vector<128x8xf32> -> vector<128x8xf32>
    %7 = arith.addf %3, %6 : vector<128x8xf32>
    %c0_6 = arith.constant 0 : index
    %c0_7 = arith.constant 0 : index
    %8 = vector.load %arg7[%c0_6, %c0_7] : memref<128x8xf32, #tpu.memory_space<vmem>>, vector<128x8xf32>
    tpu.vector_store %arg7[%c0_6, %c0_7], %7 {strides = array<i32>} : memref<128x8xf32, #tpu.memory_space<vmem>>, vector<128x8xf32>,
    %c1_i32 = arith.constant 1 : i32
    %9 = arith.cmpi eq, %arg1, %c1_i32 : i32
    %10 = arith.extui %9 : i1 to i32
    %c0_i32_8 = arith.constant 0 : i32
    %11 = arith.cmpi ne, %10, %c0_i32_8 : i32
    scf.if %11 {
      %c0_9 = arith.constant 0 : index
      %c0_10 = arith.constant 0 : index
      %12 = vector.load %arg7[%c0_9, %c0_10] : memref<128x8xf32, #tpu.memory_space<vmem>>, vector<128x8xf32>
      %13 = arith.truncf %12 : vector<128x8xf32> to vector<128x8xbf16>
      %c0_11 = arith.constant 0 : index
      %c0_12 = arith.constant 0 : index
      %14 = vector.load %arg4[%c0_11, %c0_12] : memref<8x32xbf16, #tpu.memory_space<vmem>>, vector<8x32xbf16>
      %cst_13 = arith.constant dense<0.000000e+00> : vector<128x32xf32>
      %15 = tpu.matmul %13, %14, %cst_13 {dimension_numbers = #tpu.dot_dimension_numbers<[1], [0], [0], [1], [0, 0, 1, 1], [], []>} : vector<128x8xbf16>, vector<8x32xbf16>, vector<128x32xf32> -> vector<128x32xf32>
      %c0_14 = arith.constant 0 : index
      %c0_15 = arith.constant 0 : index
      %16 = vector.load %arg5[%c0_14, %c0_15] : memref<1x32xf32, #tpu.memory_space<vmem>>, vector<1x32xf32>
      %17 = vector.broadcast %16 : vector<1x32xf32> to vector<128x32xf32>
      %18 = arith.addf %15, %17 : vector<128x32xf32>
      %cst_16 = arith.constant 0.000000e+00 : f32
      %19 = vector.broadcast %cst_16 : f32 to vector<128x32xf32>
      %20 = arith.maximumf %18, %19 : vector<128x32xf32>
      %21 = arith.truncf %20 : vector<128x32xf32> to vector<128x32xbf16>
      %c0_17 = arith.constant 0 : index
      %c0_18 = arith.constant 0 : index
      %22 = vector.load %arg6[%c0_17, %c0_18] : memref<128x32xbf16, #tpu.memory_space<vmem>>, vector<128x32xbf16>
      tpu.vector_store %arg6[%c0_17, %c0_18], %21 {strides = array<i32>} : memref<128x32xbf16, #tpu.memory_space<vmem>>, vector<128x32xbf16>,
    } else {
    }
    return
  }
  func.func @transform_0(%arg0: i32, %arg1: i32) -> (i32, i32) {
    %c0_i32 = arith.constant 0 : i32
    return %arg0, %arg1 : i32, i32
  }
  func.func @transform_1(%arg0: i32, %arg1: i32) -> (i32, i32) {
    %c0_i32 = arith.constant 0 : i32
    %c0_i32_0 = arith.constant 0 : i32
    return %arg1, %c0_i32 : i32, i32
  }
  func.func @transform_2(%arg0: i32, %arg1: i32) -> (i32, i32) {
    %c0_i32 = arith.constant 0 : i32
    %c0_i32_0 = arith.constant 0 : i32
    %c0_i32_1 = arith.constant 0 : i32
    return %c0_i32, %c0_i32_0 : i32, i32
  }
  func.func @transform_3(%arg0: i32, %arg1: i32) -> (i32, i32) {
    %c0_i32 = arith.constant 0 : i32
    %c0_i32_0 = arith.constant 0 : i32
    %c0_i32_1 = arith.constant 0 : i32
    return %c0_i32, %c0_i32_0 : i32, i32
  }
  func.func @transform_4(%arg0: i32, %arg1: i32) -> (i32, i32) {
    %c0_i32 = arith.constant 0 : i32
    %c0_i32_0 = arith.constant 0 : i32
    return %arg0, %c0_i32 : i32, i32
  }
}

module attributes {stable_mosaic.version = 11 : i64} {
  func.func @_gcn_layer2_kernel(%arg0: i32, %arg1: i32, %arg2: memref<128x128xbf16, #tpu.memory_space<vmem>>, %arg3: memref<128x32xbf16, #tpu.memory_space<vmem>>, %arg4: memref<32x128xbf16, #tpu.memory_space<vmem>>, %arg5: memref<1x128xf32, #tpu.memory_space<vmem>>, %arg6: memref<128x128xf32, #tpu.memory_space<vmem>>, %arg7: memref<128x32xf32, #tpu.memory_space<vmem>>) attributes {dimension_semantics = [#tpu.dimension_semantics<parallel>, #tpu.dimension_semantics<arbitrary>], iteration_bounds = array<i64: 2, 2>, scalar_prefetch = 0 : i64, scratch_operands = 1 : i64, tpu.core_type = #tpu.core_type<tc>, window_params = [{transform_indices = @transform_0, window_bounds = array<i64: 128, 128>}, {transform_indices = @transform_1, window_bounds = array<i64: 128, 32>}, {pipeline_mode = #tpu.pipeline_mode<synchronous>, transform_indices = @transform_2, window_bounds = array<i64: 32, 128>}, {pipeline_mode = #tpu.pipeline_mode<synchronous>, transform_indices = @transform_3, window_bounds = array<i64: 1, 128>}, {transform_indices = @transform_4, window_bounds = array<i64: 128, 128>}]} {
    %c0_i32 = arith.constant 0 : i32
    %0 = arith.cmpi eq, %arg1, %c0_i32 : i32
    %1 = arith.extui %0 : i1 to i32
    %c0_i32_0 = arith.constant 0 : i32
    %2 = arith.cmpi ne, %1, %c0_i32_0 : i32
    scf.if %2 {
      %cst_9 = arith.constant 0.000000e+00 : f32
      %12 = vector.broadcast %cst_9 : f32 to vector<128x32xf32>
      %c0_10 = arith.constant 0 : index
      %c0_11 = arith.constant 0 : index
      %13 = vector.load %arg7[%c0_10, %c0_11] : memref<128x32xf32, #tpu.memory_space<vmem>>, vector<128x32xf32>
      tpu.vector_store %arg7[%c0_10, %c0_11], %12 {strides = array<i32>} : memref<128x32xf32, #tpu.memory_space<vmem>>, vector<128x32xf32>,
    } else {
    }
    %c0 = arith.constant 0 : index
    %c0_1 = arith.constant 0 : index
    %3 = vector.load %arg7[%c0, %c0_1] : memref<128x32xf32, #tpu.memory_space<vmem>>, vector<128x32xf32>
    %c0_2 = arith.constant 0 : index
    %c0_3 = arith.constant 0 : index
    %4 = vector.load %arg2[%c0_2, %c0_3] : memref<128x128xbf16, #tpu.memory_space<vmem>>, vector<128x128xbf16>
    %c0_4 = arith.constant 0 : index
    %c0_5 = arith.constant 0 : index
    %5 = vector.load %arg3[%c0_4, %c0_5] : memref<128x32xbf16, #tpu.memory_space<vmem>>, vector<128x32xbf16>
    %cst = arith.constant dense<0.000000e+00> : vector<128x32xf32>
    %6 = tpu.matmul %4, %5, %cst {dimension_numbers = #tpu.dot_dimension_numbers<[1], [0], [0], [1], [0, 0, 1, 1], [], []>} : vector<128x128xbf16>, vector<128x32xbf16>, vector<128x32xf32> -> vector<128x32xf32>
    %7 = arith.addf %3, %6 : vector<128x32xf32>
    %c0_6 = arith.constant 0 : index
    %c0_7 = arith.constant 0 : index
    %8 = vector.load %arg7[%c0_6, %c0_7] : memref<128x32xf32, #tpu.memory_space<vmem>>, vector<128x32xf32>
    tpu.vector_store %arg7[%c0_6, %c0_7], %7 {strides = array<i32>} : memref<128x32xf32, #tpu.memory_space<vmem>>, vector<128x32xf32>,
    %c1_i32 = arith.constant 1 : i32
    %9 = arith.cmpi eq, %arg1, %c1_i32 : i32
    %10 = arith.extui %9 : i1 to i32
    %c0_i32_8 = arith.constant 0 : i32
    %11 = arith.cmpi ne, %10, %c0_i32_8 : i32
    scf.if %11 {
      %c0_9 = arith.constant 0 : index
      %c0_10 = arith.constant 0 : index
      %12 = vector.load %arg7[%c0_9, %c0_10] : memref<128x32xf32, #tpu.memory_space<vmem>>, vector<128x32xf32>
      %13 = arith.truncf %12 : vector<128x32xf32> to vector<128x32xbf16>
      %c0_11 = arith.constant 0 : index
      %c0_12 = arith.constant 0 : index
      %14 = vector.load %arg4[%c0_11, %c0_12] : memref<32x128xbf16, #tpu.memory_space<vmem>>, vector<32x128xbf16>
      %cst_13 = arith.constant dense<0.000000e+00> : vector<128x128xf32>
      %15 = tpu.matmul %13, %14, %cst_13 {dimension_numbers = #tpu.dot_dimension_numbers<[1], [0], [0], [1], [0, 0, 1, 1], [], []>} : vector<128x32xbf16>, vector<32x128xbf16>, vector<128x128xf32> -> vector<128x128xf32>
      %c0_14 = arith.constant 0 : index
      %c0_15 = arith.constant 0 : index
      %16 = vector.load %arg5[%c0_14, %c0_15] : memref<1x128xf32, #tpu.memory_space<vmem>>, vector<1x128xf32>
      %17 = vector.broadcast %16 : vector<1x128xf32> to vector<128x128xf32>
      %18 = arith.addf %15, %17 : vector<128x128xf32>
      %cst_16 = arith.constant dense<0xFF800000> : vector<128xf32>
      %19 = vector.multi_reduction <maximumf>, %18, %cst_16 [1] : vector<128x128xf32> to vector<128xf32>
      %20 = vector.shape_cast %19 : vector<128xf32> to vector<128x1xf32>
      %21 = vector.broadcast %20 : vector<128x1xf32> to vector<128x128xf32>
      %22 = arith.subf %18, %21 : vector<128x128xf32>
      %23 = math.exp %22 : vector<128x128xf32>
      %cst_17 = arith.constant dense<0.000000e+00> : vector<128xf32>
      %24 = vector.multi_reduction <add>, %23, %cst_17 [1] : vector<128x128xf32> to vector<128xf32>
      %25 = vector.shape_cast %24 : vector<128xf32> to vector<128x1xf32>
      %26 = tpu.reciprocal %25 {approx = true} : vector<128x1xf32> -> vector<128x1xf32>
      %27 = vector.broadcast %26 : vector<128x1xf32> to vector<128x128xf32>
      %28 = arith.mulf %23, %27 : vector<128x128xf32>
      %c0_18 = arith.constant 0 : index
      %c0_19 = arith.constant 0 : index
      %29 = vector.load %arg6[%c0_18, %c0_19] : memref<128x128xf32, #tpu.memory_space<vmem>>, vector<128x128xf32>
      tpu.vector_store %arg6[%c0_18, %c0_19], %28 {strides = array<i32>} : memref<128x128xf32, #tpu.memory_space<vmem>>, vector<128x128xf32>,
    } else {
    }
    return
  }
  func.func @transform_0(%arg0: i32, %arg1: i32) -> (i32, i32) {
    %c0_i32 = arith.constant 0 : i32
    return %arg0, %arg1 : i32, i32
  }
  func.func @transform_1(%arg0: i32, %arg1: i32) -> (i32, i32) {
    %c0_i32 = arith.constant 0 : i32
    %c0_i32_0 = arith.constant 0 : i32
    return %arg1, %c0_i32 : i32, i32
  }
  func.func @transform_2(%arg0: i32, %arg1: i32) -> (i32, i32) {
    %c0_i32 = arith.constant 0 : i32
    %c0_i32_0 = arith.constant 0 : i32
    %c0_i32_1 = arith.constant 0 : i32
    return %c0_i32, %c0_i32_0 : i32, i32
  }
  func.func @transform_3(%arg0: i32, %arg1: i32) -> (i32, i32) {
    %c0_i32 = arith.constant 0 : i32
    %c0_i32_0 = arith.constant 0 : i32
    %c0_i32_1 = arith.constant 0 : i32
    return %c0_i32, %c0_i32_0 : i32, i32
  }
  func.func @transform_4(%arg0: i32, %arg1: i32) -> (i32, i32) {
    %c0_i32 = arith.constant 0 : i32
    %c0_i32_0 = arith.constant 0 : i32
    return %arg0, %c0_i32 : i32, i32
  }
}

</mosaic_0001>

<llo_original>
// kernel: gcn_forward.2
$region0: #{gcn_forward.2}
  #allocation0 [shape = 'u32[]', space=smem, size = 0x4, offset = 0x4, fixed_abs, tag = 'smem constant byte address 0x4 - core index']
  #allocation1 [shape = 'u32[72,128]{1,0:T(1,128)}', space=vmem, size = 0x9000, scoped, tag = 'internal scratch']
  #allocation2 [shape = 'f32[128,8]{1,0:T(8,128)}', space=vmem, size = 0x10000, scoped, tag = 'scratch operand']
  %s0 = inlined_call_operand.vmem [shape: bf16[256,256], index: 0, kind: input, shape index: {}]
  %s1 = inlined_call_operand.vmem [shape: bf16[256,8], index: 1, kind: input, shape index: {}]
  %s2 = inlined_call_operand.vmem [shape: bf16[8,32], index: 2, kind: input, shape index: {}]
  %s3 = inlined_call_operand.vmem [shape: f32[1,32], index: 3, kind: input, shape index: {}]
  %s4 = inlined_call_operand.vmem [shape: bf16[256,32], index: 4, kind: output, shape index: {}]
  %s5 = sld [smem:[#allocation0]]
  $region98: #{gcn_forward.2} parent=0
    _
  %s7 = ssub.s32 1, %s5
  %s8 = scalar_select 0, %s7, %s5
  $region1: #{gcn_forward.2} parent=0
    #allocation3 [shape = 'u8[65536]{0}', space=vmem, size = 0x10000, scoped, tag = 'input window, operand 0']
    loop: start=0, step=1, limit=6
    $region2: #{gcn_forward.2} parent=1 // loop_pre_header
      _
    $region3: #{gcn_forward.2} parent=1 // loop_header
      %s10 = sphi 0, %s14
      %p11 = scmp.ge.s32.totalorder %s10, 6
      %s17 = sphi 0, %s29
      %s18 = sphi 0, %s25
      %s19 = sphi 0, %s17
      %s20 = sphi 0, %s18
      %s21 = sphi 0, %s19
      %s22 = sphi 0, %s20
      %s34 = sphi 0, %s36
      %s37 = sphi 0, %s34
      %s38 = sphi 0, %s37
      %s54 = sphi 0, %s38
      %s60 = sphi 0, %s62
      %s63 = sphi 0, %s60
      %s64 = sphi 0, %s63
      %s80 = sphi 0, %s64
      %s84 = sphi 0, %s84
      %s86 = sphi 0, %s84
      %s87 = sphi 0, %s86
      %s101 = sphi 0, %s87
      %s105 = sphi 0, %s105
      %s107 = sphi 0, %s105
      %s108 = sphi 0, %s107
      %s122 = sphi 0, %s108
      %s128 = sphi 0, %s130
      %s131 = sphi 0, %s128
      %s132 = sphi 0, %s131
      %s148 = sphi 0, %s132
    $region4: #{gcn_forward.2} parent=1 // loop_header_branch
      %13 = sbr.rel (%p11) target = $region8
    $region5: #{gcn_forward.2} parent=1 // loop_body
      %s15 = ssub.s32 %s10, 1
      %s16 = ssub.s32 %s10, 2
      %s23 = sadd.s32 1, %s18
      %p24 = scmp.ge.s32.totalorder %s23, 2
      %s25 = scalar_select %p24, 0, %s23
      %s26 = sadd.s32 1, %s17
      %s27 = scalar_select %p24, %s26, %s17
      %p28 = scmp.ge.s32.totalorder %s27, 2
      %s29 = scalar_select %p28, 0, %s27
      %s30 = ssub.s32 %s17, %s29
      %s31 = ssub.s32 %s18, %s25
      %s32 = sor.u32 %s30, %s31
      %p33 = scmp.eq.s32.totalorder %s32, 0
      %s35 = sadd.s32 %s34, 1
      %s36 = scalar_select %p33, %s34, %s35
      %p39 = pneg %p33
      %p40 = scmp.eq.s32.totalorder %s10, 3
      %p41 = por %p39, %p40
      %p42 = scmp.ne.s32.totalorder %s34, %s37
      %p43 = scmp.eq.s32.totalorder %s10, 0
      %p44 = por %p42, %p43
      %p45 = scmp.ne.s32.totalorder %s34, %s37
      %p46 = scmp.eq.s32.totalorder %s15, 3
      %p47 = por %p45, %p46
      %p48 = scmp.ne.s32.totalorder %s37, %s38
      %p49 = scmp.eq.s32.totalorder %s15, 0
      %p50 = por %p48, %p49
      %p51 = scmp.ne.s32.totalorder %s37, %s38
      %p52 = scmp.eq.s32.totalorder %s16, 3
      %p53 = por %p51, %p52
      %p55 = scmp.ne.s32.totalorder %s38, %s54
      %p56 = scmp.eq.s32.totalorder %s16, 0
      %p57 = por %p55, %p56
      %s58 = ssub.s32 %s18, %s25
      %p59 = scmp.eq.s32.totalorder %s58, 0
      %s61 = sadd.s32 %s60, 1
      %s62 = scalar_select %p59, %s60, %s61
      %p65 = pneg %p59
      %p66 = scmp.eq.s32.totalorder %s10, 3
      %p67 = por %p65, %p66
      %p68 = scmp.ne.s32.totalorder %s60, %s63
      %p69 = scmp.eq.s32.totalorder %s10, 0
      %p70 = por %p68, %p69
      %p71 = scmp.ne.s32.totalorder %s60, %s63
      %p72 = scmp.eq.s32.totalorder %s15, 3
      %p73 = por %p71, %p72
      %p74 = scmp.ne.s32.totalorder %s63, %s64
      %p75 = scmp.eq.s32.totalorder %s15, 0
      %p76 = por %p74, %p75
      %p77 = scmp.ne.s32.totalorder %s63, %s64
      %p78 = scmp.eq.s32.totalorder %s16, 3
      %p79 = por %p77, %p78
      %p81 = scmp.ne.s32.totalorder %s64, %s80
      %p82 = scmp.eq.s32.totalorder %s16, 0
      %p83 = por %p81, %p82
      %s85 = sadd.s32 %s84, 1
      %p88 = scmp.eq.s32.totalorder %s10, 3
      %p89 = scmp.ne.s32.totalorder %s84, %s86
      %p90 = scmp.eq.s32.totalorder %s10, 0
      %p91 = por %p89, %p90
      %p92 = scmp.ne.s32.totalorder %s84, %s86
      %p93 = scmp.eq.s32.totalorder %s15, 3
      %p94 = por %p92, %p93
      %p95 = scmp.ne.s32.totalorder %s86, %s87
      %p96 = scmp.eq.s32.totalorder %s15, 0
      %p97 = por %p95, %p96
      %p98 = scmp.ne.s32.totalorder %s86, %s87
      %p99 = scmp.eq.s32.totalorder %s16, 3
      %p100 = por %p98, %p99
      %p102 = scmp.ne.s32.totalorder %s87, %s101
      %p103 = scmp.eq.s32.totalorder %s16, 0
      %p104 = por %p102, %p103
      %s106 = sadd.s32 %s105, 1
      %p109 = scmp.eq.s32.totalorder %s10, 3
      %p110 = scmp.ne.s32.totalorder %s105, %s107
      %p111 = scmp.eq.s32.totalorder %s10, 0
      %p112 = por %p110, %p111
      %p113 = scmp.ne.s32.totalorder %s105, %s107
      %p114 = scmp.eq.s32.totalorder %s15, 3
      %p115 = por %p113, %p114
      %p116 = scmp.ne.s32.totalorder %s107, %s108
      %p117 = scmp.eq.s32.totalorder %s15, 0
      %p118 = por %p116, %p117
      %p119 = scmp.ne.s32.totalorder %s107, %s108
      %p120 = scmp.eq.s32.totalorder %s16, 3
      %p121 = por %p119, %p120
      %p123 = scmp.ne.s32.totalorder %s108, %s122
      %p124 = scmp.eq.s32.totalorder %s16, 0
      %p125 = por %p123, %p124
      %s126 = ssub.s32 %s17, %s29
      %p127 = scmp.eq.s32.totalorder %s126, 0
      %s129 = sadd.s32 %s128, 1
      %s130 = scalar_select %p127, %s128, %s129
      %p133 = pneg %p127
      %p134 = scmp.eq.s32.totalorder %s10, 3
      %p135 = por %p133, %p134
      %p136 = scmp.ne.s32.totalorder %s128, %s131
      %p137 = scmp.eq.s32.totalorder %s10, 0
      %p138 = por %p136, %p137
      %p139 = scmp.ne.s32.totalorder %s128, %s131
      %p140 = scmp.eq.s32.totalorder %s15, 3
      %p141 = por %p139, %p140
      %p142 = scmp.ne.s32.totalorder %s131, %s132
      %p143 = scmp.eq.s32.totalorder %s15, 0
      %p144 = por %p142, %p143
      %p145 = scmp.ne.s32.totalorder %s131, %s132
      %p146 = scmp.eq.s32.totalorder %s16, 3
      %p147 = por %p145, %p146
      %p149 = scmp.ne.s32.totalorder %s132, %s148
      %p150 = scmp.eq.s32.totalorder %s16, 0
      %p151 = por %p149, %p150
      %p152 = scmp.le.s32.totalorder 1, %s10
      %p153 = scmp.lt.s32.totalorder %s10, 5
      %p154 = pnand %p152, %p153
      %p155 = pneg %p154
      // Predicated region
      $region9: #{gcn_forward.2} parent=5 // pred_check
        _
      $region10: #{gcn_forward.2} parent=5 // pred_check_branch
        %157 = sbr.rel (%p154) target = $region12
      $region11: #{gcn_forward.2} parent=5 // pred_region
        %s158 = ssub.s32 %s10, 1
        // Predicated region
        $region13: #{gcn_forward.2} parent=11 // pred_check
          %p159 = pneg %p97
        $region14: #{gcn_forward.2} parent=11 // pred_check_branch
          %161 = sbr.rel (%p159) target = $region16
        $region15: #{gcn_forward.2} parent=11 // pred_region
          _
        $region16: #{gcn_forward.2} parent=11 // pred_fallthru
          _
        // Predicated region
        $region17: #{gcn_forward.2} parent=11 // pred_check
          %p162 = pneg %p118
        $region18: #{gcn_forward.2} parent=11 // pred_check_branch
          %164 = sbr.rel (%p162) target = $region20
        $region19: #{gcn_forward.2} parent=11 // pred_region
          _
        $region20: #{gcn_forward.2} parent=11 // pred_fallthru
          _
      $region12: #{gcn_forward.2} parent=5 // pred_fallthru
        _
      %p165 = scmp.lt.s32.totalorder %s10, 4
      // Predicated region
      $region21: #{gcn_forward.2} parent=5 // pred_check
        %p166 = pneg %p165
      $region22: #{gcn_forward.2} parent=5 // pred_check_branch
        %168 = sbr.rel (%p166) target = $region24
      $region23: #{gcn_forward.2} parent=5 // pred_region
        // Predicated region
        $region25: #{gcn_forward.2} parent=23 // pred_check
          %p169 = pneg %p44
        $region26: #{gcn_forward.2} parent=23 // pred_check_branch
          %171 = sbr.rel (%p169) target = $region28
        $region27: #{gcn_forward.2} parent=23 // pred_region
          %s172 = sand.u32 %s34, 1
          %s173 = sand.u32 %s34, 1
          %s174 = smul.addr %s173, 64
          %s175 = scalar_lea.vmem [#allocation3], %s174
          %s176 = smul.u32 16, %s17
          %s177 = smul.addr %s176, 2
          %s178 = sadd.s32 %s18, %s177
          %s179 = smul.addr %s178, 4
          %s180 = scalar_lea.vmem %s0, %s179
          // Predicated region
          $region29: #{gcn_forward.2} parent=27 // pred_check
            _
          $region30: #{gcn_forward.2} parent=27 // pred_check_branch
            %182 = sbr.rel (0) target = $region32
          $region31: #{gcn_forward.2} parent=27 // pred_region
            // Predicated region
            $region33: #{gcn_forward.2} parent=31 // pred_check
              _
            $region34: #{gcn_forward.2} parent=31 // pred_check_branch
              %184 = sbr.rel target = $region36
            $region35: #{gcn_forward.2} parent=31 // pred_region
              // Predicated region
              $region48: #{gcn_forward.2} parent=35 // pred_check
                _
              $region49: #{gcn_forward.2} parent=35 // pred_check_branch
                %230 = sbr.rel (0) target = $region51
              $region50: #{gcn_forward.2} parent=35 // pred_region
                loop: start=0, step=1, limit=1
                $region52: #{gcn_forward.2} parent=50 // loop_pre_header
                  _
                $region53: #{gcn_forward.2} parent=50 // loop_header
                  %s232 = sphi 0, %s236
                  %p233 = scmp.ge.s32.totalorder %s232, 1
                  %s237 = sphi %s180, %s180
                  %s238 = sphi %s175, %s175
                $region54: #{gcn_forward.2} parent=50 // loop_header_branch
                  %235 = sbr.rel (%p233) target = $region58
                $region55: #{gcn_forward.2} parent=50 // loop_body
                  _
                $region56: #{gcn_forward.2} parent=50 // loop_footer
                  %s236 = sadd.s32 1, %s232
                $region57: #{gcn_forward.2} parent=50 // loop_footer_branch
                  %231 = sbr.rel target = $region53
                $region58: #{gcn_forward.2} parent=50 // loop_exit
                  _
                %s240 = ssub.s32 16, 1
                loop: start=0, step=1, limit=1
                $region59: #{gcn_forward.2} parent=50 // loop_pre_header
                  _
                $region60: #{gcn_forward.2} parent=50 // loop_header
                  %s242 = sphi 0, %s246
                  %p243 = scmp.ge.s32.totalorder %s242, 1
                  %s247 = sphi %s180, %s180
                  %s248 = sphi %s175, %s175
                $region61: #{gcn_forward.2} parent=50 // loop_header_branch
                  %245 = sbr.rel (%p243) target = $region65
                $region62: #{gcn_forward.2} parent=50 // loop_body
                  %v249 = vld [vmem:[%s247] sm:%s240]
                  %250 = vst [vmem:[%s248] sm:%s240] %v249
                  %v251 = vld [vmem:[%s247 + $0x8] sm:%s240]
                  %252 = vst [vmem:[%s248 + $0x4] sm:%s240] %v251
                  %v253 = vld [vmem:[%s247 + $0x10] sm:%s240]
                  %254 = vst [vmem:[%s248 + $0x8] sm:%s240] %v253
                  %v255 = vld [vmem:[%s247 + $0x18] sm:%s240]
                  %256 = vst [vmem:[%s248 + $0xc] sm:%s240] %v255
                  %v257 = vld [vmem:[%s247 + $0x20] sm:%s240]
                  %258 = vst [vmem:[%s248 + $0x10] sm:%s240] %v257
                  %v259 = vld [vmem:[%s247 + $0x28] sm:%s240]
                  %260 = vst [vmem:[%s248 + $0x14] sm:%s240] %v259
                  %v261 = vld [vmem:[%s247 + $0x30] sm:%s240]
                  %262 = vst [vmem:[%s248 + $0x18] sm:%s240] %v261
                  %v263 = vld [vmem:[%s247 + $0x38] sm:%s240]
                  %264 = vst [vmem:[%s248 + $0x1c] sm:%s240] %v263
                  %v265 = vld [vmem:[%s247 + $0x40] sm:%s240]
                  %266 = vst [vmem:[%s248 + $0x20] sm:%s240] %v265
                  %v267 = vld [vmem:[%s247 + $0x48] sm:%s240]
                  %268 = vst [vmem:[%s248 + $0x24] sm:%s240] %v267
                  %v269 = vld [vmem:[%s247 + $0x50] sm:%s240]
                  %270 = vst [vmem:[%s248 + $0x28] sm:%s240] %v269
                  %v271 = vld [vmem:[%s247 + $0x58] sm:%s240]
                  %272 = vst [vmem:[%s248 + $0x2c] sm:%s240] %v271
                  %v273 = vld [vmem:[%s247 + $0x60] sm:%s240]
                  %274 = vst [vmem:[%s248 + $0x30] sm:%s240] %v273
                  %v275 = vld [vmem:[%s247 + $0x68] sm:%s240]
                  %276 = vst [vmem:[%s248 + $0x34] sm:%s240] %v275
                  %v277 = vld [vmem:[%s247 + $0x70] sm:%s240]
                  %278 = vst [vmem:[%s248 + $0x38] sm:%s240] %v277
                  %v279 = vld [vmem:[%s247 + $0x78] sm:%s240]
                  %280 = vst [vmem:[%s248 + $0x3c] sm:%s240] %v279
                $region63: #{gcn_forward.2} parent=50 // loop_footer
                  %s246 = sadd.s32 1, %s242
                $region64: #{gcn_forward.2} parent=50 // loop_footer_branch
                  %241 = sbr.rel target = $region60
                $region65: #{gcn_forward.2} parent=50 // loop_exit
                  _
              $region51: #{gcn_forward.2} parent=35 // pred_fallthru
                _
            $region36: #{gcn_forward.2} parent=31 // pred_fallthru
              _
            // Predicated region
            $region37: #{gcn_forward.2} parent=31 // pred_check
              _
            $region38: #{gcn_forward.2} parent=31 // pred_check_branch
              %186 = sbr.rel (0) target = $region40
            $region39: #{gcn_forward.2} parent=31 // pred_region
              %s188 = ssub.s32 16, 1
              loop: start=0, step=1, limit=1
              $region41: #{gcn_forward.2} parent=39 // loop_pre_header
                _
              $region42: #{gcn_forward.2} parent=39 // loop_header
                %s190 = sphi 0, %s194
                %p191 = scmp.ge.s32.totalorder %s190, 1
                %s195 = sphi %s180, %s180
                %s196 = sphi %s175, %s175
              $region43: #{gcn_forward.2} parent=39 // loop_header_branch
                %193 = sbr.rel (%p191) target = $region47
              $region44: #{gcn_forward.2} parent=39 // loop_body
                %v197 = vld [vmem:[%s195] sm:%s188]
                %198 = vst [vmem:[%s196] sm:%s188] %v197
                %v199 = vld [vmem:[%s195 + $0x8] sm:%s188]
                %200 = vst [vmem:[%s196 + $0x4] sm:%s188] %v199
                %v201 = vld [vmem:[%s195 + $0x10] sm:%s188]
                %202 = vst [vmem:[%s196 + $0x8] sm:%s188] %v201
                %v203 = vld [vmem:[%s195 + $0x18] sm:%s188]
                %204 = vst [vmem:[%s196 + $0xc] sm:%s188] %v203
                %v205 = vld [vmem:[%s195 + $0x20] sm:%s188]
                %206 = vst [vmem:[%s196 + $0x10] sm:%s188] %v205
                %v207 = vld [vmem:[%s195 + $0x28] sm:%s188]
                %208 = vst [vmem:[%s196 + $0x14] sm:%s188] %v207
                %v209 = vld [vmem:[%s195 + $0x30] sm:%s188]
                %210 = vst [vmem:[%s196 + $0x18] sm:%s188] %v209
                %v211 = vld [vmem:[%s195 + $0x38] sm:%s188]
                %212 = vst [vmem:[%s196 + $0x1c] sm:%s188] %v211
                %v213 = vld [vmem:[%s195 + $0x40] sm:%s188]
                %214 = vst [vmem:[%s196 + $0x20] sm:%s188] %v213
                %v215 = vld [vmem:[%s195 + $0x48] sm:%s188]
                %216 = vst [vmem:[%s196 + $0x24] sm:%s188] %v215
                %v217 = vld [vmem:[%s195 + $0x50] sm:%s188]
                %218 = vst [vmem:[%s196 + $0x28] sm:%s188] %v217
                %v219 = vld [vmem:[%s195 + $0x58] sm:%s188]
                %220 = vst [vmem:[%s196 + $0x2c] sm:%s188] %v219
                %v221 = vld [vmem:[%s195 + $0x60] sm:%s188]
                %222 = vst [vmem:[%s196 + $0x30] sm:%s188] %v221
                %v223 = vld [vmem:[%s195 + $0x68] sm:%s188]
                %224 = vst [vmem:[%s196 + $0x34] sm:%s188] %v223
                %v225 = vld [vmem:[%s195 + $0x70] sm:%s188]
                %226 = vst [vmem:[%s196 + $0x38] sm:%s188] %v225
                %v227 = vld [vmem:[%s195 + $0x78] sm:%s188]
                %228 = vst [vmem:[%s196 + $0x3c] sm:%s188] %v227
              $region45: #{gcn_forward.2} parent=39 // loop_footer
                %s194 = sadd.s32 1, %s190
              $region46: #{gcn_forward.2} parent=39 // loop_footer_branch
                %189 = sbr.rel target = $region42
              $region47: #{gcn_forward.2} parent=39 // loop_exit
                _
            $region40: #{gcn_forward.2} parent=31 // pred_fallthru
              _
          $region32: #{gcn_forward.2} parent=27 // pred_fallthru
            _
          %281 = vnop
        $region28: #{gcn_forward.2} parent=23 // pred_fallthru
          _
        // Predicated region
        $region66: #{gcn_forward.2} parent=23 // pred_check
          %p282 = pneg %p70
        $region67: #{gcn_forward.2} parent=23 // pred_check_branch
          %284 = sbr.rel (%p282) target = $region69
        $region68: #{gcn_forward.2} parent=23 // pred_region
          %s285 = smul.u32 16, %s18
          %p286 = scmp.lt.s32.totalorder %s285, 31
          %s287 = scalar_select %p286, %s285, 31
          %s288 = smul.addr %s287, 4
          %s289 = scalar_lea.vmem %s1, %s288
          %s290 = smul.u32 16, %s18
        $region69: #{gcn_forward.2} parent=23 // pred_fallthru
          _
      $region24: #{gcn_forward.2} parent=5 // pred_fallthru
        _
      %p291 = scmp.le.s32.totalorder 1, %s10
      %p292 = scmp.lt.s32.totalorder %s10, 5
      %p293 = pnand %p291, %p292
      %p294 = pneg %p293
      // Predicated region
      $region70: #{gcn_forward.2} parent=5 // pred_check
        _
      $region71: #{gcn_forward.2} parent=5 // pred_check_branch
        %296 = sbr.rel (%p293) target = $region73
      $region72: #{gcn_forward.2} parent=5 // pred_region
        %s297 = ssub.s32 %s10, 1
        %s298 = sand.u32 %s37, 1
        %s299 = sand.u32 %s37, 1
        %s300 = smul.addr %s299, 64
        %s301 = scalar_lea.vmem [#allocation3], %s300
        // Predicated region
        $region74: #{gcn_forward.2} parent=72 // pred_check
          %p302 = pneg %p50
        $region75: #{gcn_forward.2} parent=72 // pred_check_branch
          %304 = sbr.rel (%p302) target = $region77
        $region76: #{gcn_forward.2} parent=72 // pred_region
          _
        $region77: #{gcn_forward.2} parent=72 // pred_fallthru
          _
        %s305 = sand.u32 %s37, 1
        %s306 = sand.u32 %s37, 1
        %s307 = smul.addr %s306, 64
        %s308 = scalar_lea.vmem [#allocation3], %s307
        %p309 = pneg %p50
        %p310 = pneg %p47
        %s311 = smul.u32 16, %s20
        %p312 = scmp.lt.s32.totalorder %s311, 31
        %s313 = scalar_select %p312, %s311, 31
        %s314 = smul.addr %s313, 4
        %s315 = scalar_lea.vmem %s1, %s314
        %p316 = pneg %p76
        %p317 = pneg %p73
        %p318 = pneg %p97
        %p319 = pneg %p94
        %p320 = pneg %p118
        %p321 = pneg %p115
        %p322 = pneg %p144
        %p323 = pneg %p141
        %s324 = smul.u32 16, %s19
        %p325 = scmp.lt.s32.totalorder %s324, 31
        %s326 = scalar_select %p325, %s324, 31
        %s327 = smul.addr %s326, 4
        %s328 = scalar_lea.vmem %s4, %s327
        %s329 = smul.u32 16, %s19
        %s330 = smul.u32 16, %s20
        %p331 = scmp.lt.s32.totalorder %s330, 31
        %s332 = scalar_select %p331, %s330, 31
        %s333 = smul.addr %s332, 4
        %s334 = scalar_lea.vmem %s1, %s333
        %s335 = smul.u32 16, %s20
        %s336 = smul.u32 16, %s19
        %p337 = scmp.lt.s32.totalorder %s336, 31
        %s338 = scalar_select %p337, %s336, 31
        %s339 = smul.addr %s338, 4
        %s340 = scalar_lea.vmem %s4, %s339
        %s341 = smul.u32 16, %s19
        %p343 = scmp.eq.s32.totalorder %s20, 0
        // Predicated region
        $region78: #{gcn_forward.2} parent=72 // pred_check
          %p344 = pneg %p343
        $region79: #{gcn_forward.2} parent=72 // pred_check_branch
          %346 = sbr.rel (%p344) target = $region81
        $region80: #{gcn_forward.2} parent=72 // pred_region
          %vm347 = vcmask 64512
          %348 = vst.msk [vmem:[#allocation2] sm:$0xff] %vm347, 0.0
          %349 = vst.msk [vmem:[#allocation2 + $0x8] sm:$0xff] %vm347, 0.0
          %350 = vst.msk [vmem:[#allocation2 + $0x10] sm:$0xff] %vm347, 0.0
          %351 = vst.msk [vmem:[#allocation2 + $0x18] sm:$0xff] %vm347, 0.0
          %352 = vst.msk [vmem:[#allocation2 + $0x20] sm:$0xff] %vm347, 0.0
          %353 = vst.msk [vmem:[#allocation2 + $0x28] sm:$0xff] %vm347, 0.0
          %354 = vst.msk [vmem:[#allocation2 + $0x30] sm:$0xff] %vm347, 0.0
          %355 = vst.msk [vmem:[#allocation2 + $0x38] sm:$0xff] %vm347, 0.0
          %356 = vst.msk [vmem:[#allocation2 + $0x40] sm:$0xff] %vm347, 0.0
          %357 = vst.msk [vmem:[#allocation2 + $0x48] sm:$0xff] %vm347, 0.0
          %358 = vst.msk [vmem:[#allocation2 + $0x50] sm:$0xff] %vm347, 0.0
          %359 = vst.msk [vmem:[#allocation2 + $0x58] sm:$0xff] %vm347, 0.0
          %360 = vst.msk [vmem:[#allocation2 + $0x60] sm:$0xff] %vm347, 0.0
          %361 = vst.msk [vmem:[#allocation2 + $0x68] sm:$0xff] %vm347, 0.0
          %362 = vst.msk [vmem:[#allocation2 + $0x70] sm:$0xff] %vm347, 0.0
          %363 = vst.msk [vmem:[#allocation2 + $0x78] sm:$0xff] %vm347, 0.0
        $region81: #{gcn_forward.2} parent=72 // pred_fallthru
          _
        %v364 = vld [vmem:[#allocation2] sm:$0xff]
        %v365 = vld [vmem:[#allocation2 + $0x8] sm:$0xff]
        %v366 = vld [vmem:[#allocation2 + $0x10] sm:$0xff]
        %v367 = vld [vmem:[#allocation2 + $0x18] sm:$0xff]
        %v368 = vld [vmem:[#allocation2 + $0x20] sm:$0xff]
        %v369 = vld [vmem:[#allocation2 + $0x28] sm:$0xff]
        %v370 = vld [vmem:[#allocation2 + $0x30] sm:$0xff]
        %v371 = vld [vmem:[#allocation2 + $0x38] sm:$0xff]
        %v372 = vld [vmem:[#allocation2 + $0x40] sm:$0xff]
        %v373 = vld [vmem:[#allocation2 + $0x48] sm:$0xff]
        %v374 = vld [vmem:[#allocation2 + $0x50] sm:$0xff]
        %v375 = vld [vmem:[#allocation2 + $0x58] sm:$0xff]
        %v376 = vld [vmem:[#allocation2 + $0x60] sm:$0xff]
        %v377 = vld [vmem:[#allocation2 + $0x68] sm:$0xff]
        %v378 = vld [vmem:[#allocation2 + $0x70] sm:$0xff]
        %v379 = vld [vmem:[#allocation2 + $0x78] sm:$0xff]
        %v380 = vld [vmem:[%s301] sm:$0xf]
        %v381 = vld [vmem:[%s301 + $0x4] sm:$0xf]
        %v382 = vld [vmem:[%s301 + $0x8] sm:$0xf]
        %v383 = vld [vmem:[%s301 + $0xc] sm:$0xf]
        %v384 = vld [vmem:[%s301 + $0x10] sm:$0xf]
        %v385 = vld [vmem:[%s301 + $0x14] sm:$0xf]
        %v386 = vld [vmem:[%s301 + $0x18] sm:$0xf]
        %v387 = vld [vmem:[%s301 + $0x1c] sm:$0xf]
        %v388 = vld [vmem:[%s301 + $0x20] sm:$0xf]
        %v389 = vld [vmem:[%s301 + $0x24] sm:$0xf]
        %v390 = vld [vmem:[%s301 + $0x28] sm:$0xf]
        %v391 = vld [vmem:[%s301 + $0x2c] sm:$0xf]
        %v392 = vld [vmem:[%s301 + $0x30] sm:$0xf]
        %v393 = vld [vmem:[%s301 + $0x34] sm:$0xf]
        %v394 = vld [vmem:[%s301 + $0x38] sm:$0xf]
        %v395 = vld [vmem:[%s301 + $0x3c] sm:$0xf]
        %v396 = vld [vmem:[%s334] sm:$0xf]
        %v397 = vld [vmem:[%s334 + $0x4] sm:$0xf]
        %v398 = vld [vmem:[%s334 + $0x8] sm:$0xf]
        %v399 = vld [vmem:[%s334 + $0xc] sm:$0xf]
        %v400 = vld [vmem:[%s334 + $0x10] sm:$0xf]
        %v401 = vld [vmem:[%s334 + $0x14] sm:$0xf]
        %v402 = vld [vmem:[%s334 + $0x18] sm:$0xf]
        %v403 = vld [vmem:[%s334 + $0x1c] sm:$0xf]
        %v404 = vld [vmem:[%s334 + $0x20] sm:$0xf]
        %v405 = vld [vmem:[%s334 + $0x24] sm:$0xf]
        %v406 = vld [vmem:[%s334 + $0x28] sm:$0xf]
        %v407 = vld [vmem:[%s334 + $0x2c] sm:$0xf]
        %v408 = vld [vmem:[%s334 + $0x30] sm:$0xf]
        %v409 = vld [vmem:[%s334 + $0x34] sm:$0xf]
        %v410 = vld [vmem:[%s334 + $0x38] sm:$0xf]
        %v411 = vld [vmem:[%s334 + $0x3c] sm:$0xf]
        %v428 = vunpack.c.l.b16 %v380
        %v429 = vunpack.c.l.b16 %v381
        %v430 = vunpack.c.l.b16 %v382
        %v431 = vunpack.c.l.b16 %v383
        %v432 = vunpack.c.l.b16 %v384
        %v433 = vunpack.c.l.b16 %v385
        %v434 = vunpack.c.l.b16 %v386
        %v435 = vunpack.c.l.b16 %v387
        %v436 = vunpack.c.l.b16 %v388
        %v437 = vunpack.c.l.b16 %v389
        %v438 = vunpack.c.l.b16 %v390
        %v439 = vunpack.c.l.b16 %v391
        %v440 = vunpack.c.l.b16 %v392
        %v441 = vunpack.c.l.b16 %v393
        %v442 = vunpack.c.l.b16 %v394
        %v443 = vunpack.c.l.b16 %v395
        %v444 = vpack.c.b16 %v429, %v428
        %v445 = vpack.c.b16 %v431, %v430
        %v446 = vpack.c.b16 %v433, %v432
        %v447 = vpack.c.b16 %v435, %v434
        %v448 = vpack.c.b16 %v437, %v436
        %v449 = vpack.c.b16 %v439, %v438
        %v450 = vpack.c.b16 %v441, %v440
        %v451 = vpack.c.b16 %v443, %v442
        %v476 = vunpack.c.l.b16 %v396
        %v477 = vunpack.c.l.b16 %v397
        %v478 = vunpack.c.l.b16 %v398
        %v479 = vunpack.c.l.b16 %v399
        %v480 = vunpack.c.l.b16 %v400
        %v481 = vunpack.c.l.b16 %v401
        %v482 = vunpack.c.l.b16 %v402
        %v483 = vunpack.c.l.b16 %v403
        %v484 = vunpack.c.l.b16 %v404
        %v485 = vunpack.c.l.b16 %v405
        %v486 = vunpack.c.l.b16 %v406
        %v487 = vunpack.c.l.b16 %v407
        %v488 = vunpack.c.l.b16 %v408
        %v489 = vunpack.c.l.b16 %v409
        %v490 = vunpack.c.l.b16 %v410
        %v491 = vunpack.c.l.b16 %v411
        %v492 = vpack.c.b16 %v477, %v476
        %v493 = vpack.c.b16 %v479, %v478
        %v494 = vpack.c.b16 %v481, %v480
        %v495 = vpack.c.b16 %v483, %v482
        %v496 = vpack.c.b16 %v485, %v484
        %v497 = vpack.c.b16 %v487, %v486
        %v498 = vpack.c.b16 %v489, %v488
        %v499 = vpack.c.b16 %v491, %v490
        %508 = vmatpush.bf16.msra.mxu0 %v499
        %509 = vmatpush.bf16.msra.mxu0 %v498
        %510 = vmatpush.bf16.msra.mxu0 %v497
        %511 = vmatpush.bf16.msra.mxu0 %v496
        %512 = vmatpush.bf16.msra.mxu0 %v495
        %513 = vmatpush.bf16.msra.mxu0 %v494
        %514 = vmatpush.bf16.msra.mxu0 %v493
        %515 = vmatpush.bf16.msra.mxu0 %v492
        %516 = vmatmul.bf16.gmra.mxu0 %v444
        %v517 = vpop.f32.mrf.mxu0
        %v518 = vadd.f32 0.0, %v517
        %v519 = vpop.f32.mrf.mxu0
        %v520 = vadd.f32 0.0, %v519
        %521 = vmatmul.bf16.gmra.mxu0 %v445
        %v522 = vpop.f32.mrf.mxu0
        %v523 = vadd.f32 0.0, %v522
        %v524 = vpop.f32.mrf.mxu0
        %v525 = vadd.f32 0.0, %v524
        %526 = vmatmul.bf16.gmra.mxu0 %v446
        %v527 = vpop.f32.mrf.mxu0
        %v528 = vadd.f32 0.0, %v527
        %v529 = vpop.f32.mrf.mxu0
        %v530 = vadd.f32 0.0, %v529
        %531 = vmatmul.bf16.gmra.mxu0 %v447
        %v532 = vpop.f32.mrf.mxu0
        %v533 = vadd.f32 0.0, %v532
        %v534 = vpop.f32.mrf.mxu0
        %v535 = vadd.f32 0.0, %v534
        %536 = vmatmul.bf16.gmra.mxu0 %v448
        %v537 = vpop.f32.mrf.mxu0
        %v538 = vadd.f32 0.0, %v537
        %v539 = vpop.f32.mrf.mxu0
        %v540 = vadd.f32 0.0, %v539
        %541 = vmatmul.bf16.gmra.mxu0 %v449
        %v542 = vpop.f32.mrf.mxu0
        %v543 = vadd.f32 0.0, %v542
        %v544 = vpop.f32.mrf.mxu0
        %v545 = vadd.f32 0.0, %v544
        %546 = vmatmul.bf16.gmra.mxu0 %v450
        %v547 = vpop.f32.mrf.mxu0
        %v548 = vadd.f32 0.0, %v547
        %v549 = vpop.f32.mrf.mxu0
        %v550 = vadd.f32 0.0, %v549
        %551 = vmatmul.bf16.gmra.mxu0 %v451
        %v552 = vpop.f32.mrf.mxu0
        %v553 = vadd.f32 0.0, %v552
        %v554 = vpop.f32.mrf.mxu0
        %v555 = vadd.f32 0.0, %v554
        %556 = vdwg.mxu0
        %v557 = vadd.f32 %v364, %v518
        %v558 = vadd.f32 %v365, %v520
        %v559 = vadd.f32 %v366, %v523
        %v560 = vadd.f32 %v367, %v525
        %v561 = vadd.f32 %v368, %v528
        %v562 = vadd.f32 %v369, %v530
        %v563 = vadd.f32 %v370, %v533
        %v564 = vadd.f32 %v371, %v535
        %v565 = vadd.f32 %v372, %v538
        %v566 = vadd.f32 %v373, %v540
        %v567 = vadd.f32 %v374, %v543
        %v568 = vadd.f32 %v375, %v545
        %v569 = vadd.f32 %v376, %v548
        %v570 = vadd.f32 %v377, %v550
        %v571 = vadd.f32 %v378, %v553
        %v572 = vadd.f32 %v379, %v555
        %vm573 = vcmask 64512
        %574 = vst.msk [vmem:[#allocation2] sm:$0xff] %vm573, %v557
        %575 = vst.msk [vmem:[#allocation2 + $0x8] sm:$0xff] %vm573, %v558
        %576 = vst.msk [vmem:[#allocation2 + $0x10] sm:$0xff] %vm573, %v559
        %577 = vst.msk [vmem:[#allocation2 + $0x18] sm:$0xff] %vm573, %v560
        %578 = vst.msk [vmem:[#allocation2 + $0x20] sm:$0xff] %vm573, %v561
        %579 = vst.msk [vmem:[#allocation2 + $0x28] sm:$0xff] %vm573, %v562
        %580 = vst.msk [vmem:[#allocation2 + $0x30] sm:$0xff] %vm573, %v563
        %581 = vst.msk [vmem:[#allocation2 + $0x38] sm:$0xff] %vm573, %v564
        %582 = vst.msk [vmem:[#allocation2 + $0x40] sm:$0xff] %vm573, %v565
        %583 = vst.msk [vmem:[#allocation2 + $0x48] sm:$0xff] %vm573, %v566
        %584 = vst.msk [vmem:[#allocation2 + $0x50] sm:$0xff] %vm573, %v567
        %585 = vst.msk [vmem:[#allocation2 + $0x58] sm:$0xff] %vm573, %v568
        %586 = vst.msk [vmem:[#allocation2 + $0x60] sm:$0xff] %vm573, %v569
        %587 = vst.msk [vmem:[#allocation2 + $0x68] sm:$0xff] %vm573, %v570
        %588 = vst.msk [vmem:[#allocation2 + $0x70] sm:$0xff] %vm573, %v571
        %589 = vst.msk [vmem:[#allocation2 + $0x78] sm:$0xff] %vm573, %v572
        %p590 = scmp.eq.s32.totalorder %s20, 1
        // Predicated region
        $region82: #{gcn_forward.2} parent=72 // pred_check
          %p591 = pneg %p590
        $region83: #{gcn_forward.2} parent=72 // pred_check_branch
          %593 = sbr.rel (%p591) target = $region85
        $region84: #{gcn_forward.2} parent=72 // pred_region
          %v594 = vld [vmem:[#allocation2] sm:$0xff]
          %v595 = vld [vmem:[#allocation2 + $0x8] sm:$0xff]
          %v596 = vld [vmem:[#allocation2 + $0x10] sm:$0xff]
          %v597 = vld [vmem:[#allocation2 + $0x18] sm:$0xff]
          %v598 = vld [vmem:[#allocation2 + $0x20] sm:$0xff]
          %v599 = vld [vmem:[#allocation2 + $0x28] sm:$0xff]
          %v600 = vld [vmem:[#allocation2 + $0x30] sm:$0xff]
          %v601 = vld [vmem:[#allocation2 + $0x38] sm:$0xff]
          %v602 = vld [vmem:[#allocation2 + $0x40] sm:$0xff]
          %v603 = vld [vmem:[#allocation2 + $0x48] sm:$0xff]
          %v604 = vld [vmem:[#allocation2 + $0x50] sm:$0xff]
          %v605 = vld [vmem:[#allocation2 + $0x58] sm:$0xff]
          %v606 = vld [vmem:[#allocation2 + $0x60] sm:$0xff]
          %v607 = vld [vmem:[#allocation2 + $0x68] sm:$0xff]
          %v608 = vld [vmem:[#allocation2 + $0x70] sm:$0xff]
          %v609 = vld [vmem:[#allocation2 + $0x78] sm:$0xff]
          %v610 = vpack.c.bf16 %v595, %v594
          %v611 = vpack.c.bf16 %v597, %v596
          %v612 = vpack.c.bf16 %v599, %v598
          %v613 = vpack.c.bf16 %v601, %v600
          %v614 = vpack.c.bf16 %v603, %v602
          %v615 = vpack.c.bf16 %v605, %v604
          %v616 = vpack.c.bf16 %v607, %v606
          %v617 = vpack.c.bf16 %v609, %v608
          %v618 = vld [vmem:[%s2] sm:$0xf]
          %v619 = vld [vmem:[%s3] sm:$0x1]
          %v621 = vperm.slane %v619, 0
          %v624 = vsel %vm573, %v610, 0
          %v627 = vsel %vm573, %v611, 0
          %v630 = vsel %vm573, %v612, 0
          %v633 = vsel %vm573, %v613, 0
          %v636 = vsel %vm573, %v614, 0
          %v639 = vsel %vm573, %v615, 0
          %v642 = vsel %vm573, %v616, 0
          %v645 = vsel %vm573, %v617, 0
          %vm647 = vcmask 1043456
          %v649 = vsel %vm647, %v618, 0
          %651 = vmatpush.bf16.msra.mxu0 0
          %652 = vmatpush.bf16.msra.mxu0 0
          %653 = vmatpush.bf16.msra.mxu0 0
          %654 = vmatpush.bf16.msra.mxu0 0
          %655 = vmatpush.bf16.msra.mxu0 0
          %656 = vmatpush.bf16.msra.mxu0 0
          %657 = vmatpush.bf16.msra.mxu0 0
          %658 = vmatpush.bf16.msra.mxu0 %v649
          %659 = vmatmul.bf16.gmra.mxu0 %v624
          %v660 = vpop.f32.mrf.mxu0
          %v661 = vadd.f32 %v621, %v660
          %v662 = vpop.f32.mrf.mxu0
          %v663 = vadd.f32 %v621, %v662
          %664 = vmatmul.bf16.gmra.mxu0 %v627
          %v665 = vpop.f32.mrf.mxu0
          %v666 = vadd.f32 %v621, %v665
          %v667 = vpop.f32.mrf.mxu0
          %v668 = vadd.f32 %v621, %v667
          %669 = vmatmul.bf16.gmra.mxu0 %v630
          %v670 = vpop.f32.mrf.mxu0
          %v671 = vadd.f32 %v621, %v670
          %v672 = vpop.f32.mrf.mxu0
          %v673 = vadd.f32 %v621, %v672
          %674 = vmatmul.bf16.gmra.mxu0 %v633
          %v675 = vpop.f32.mrf.mxu0
          %v676 = vadd.f32 %v621, %v675
          %v677 = vpop.f32.mrf.mxu0
          %v678 = vadd.f32 %v621, %v677
          %679 = vmatmul.bf16.gmra.mxu0 %v636
          %v680 = vpop.f32.mrf.mxu0
          %v681 = vadd.f32 %v621, %v680
          %v682 = vpop.f32.mrf.mxu0
          %v683 = vadd.f32 %v621, %v682
          %684 = vmatmul.bf16.gmra.mxu0 %v639
          %v685 = vpop.f32.mrf.mxu0
          %v686 = vadd.f32 %v621, %v685
          %v687 = vpop.f32.mrf.mxu0
          %v688 = vadd.f32 %v621, %v687
          %689 = vmatmul.bf16.gmra.mxu0 %v642
          %v690 = vpop.f32.mrf.mxu0
          %v691 = vadd.f32 %v621, %v690
          %v692 = vpop.f32.mrf.mxu0
          %v693 = vadd.f32 %v621, %v692
          %694 = vmatmul.bf16.gmra.mxu0 %v645
          %v695 = vpop.f32.mrf.mxu0
          %v696 = vadd.f32 %v621, %v695
          %v697 = vpop.f32.mrf.mxu0
          %v698 = vadd.f32 %v621, %v697
          %699 = vdwg.mxu0
          %v700 = vmax.f32 %v661, 0.0
          %v701 = vmax.f32 %v663, 0.0
          %v702 = vmax.f32 %v666, 0.0
          %v703 = vmax.f32 %v668, 0.0
          %v704 = vmax.f32 %v671, 0.0
          %v705 = vmax.f32 %v673, 0.0
          %v706 = vmax.f32 %v676, 0.0
          %v707 = vmax.f32 %v678, 0.0
          %v708 = vmax.f32 %v681, 0.0
          %v709 = vmax.f32 %v683, 0.0
          %v710 = vmax.f32 %v686, 0.0
          %v711 = vmax.f32 %v688, 0.0
          %v712 = vmax.f32 %v691, 0.0
          %v713 = vmax.f32 %v693, 0.0
          %v714 = vmax.f32 %v696, 0.0
          %v715 = vmax.f32 %v698, 0.0
          %v716 = vpack.c.bf16 %v700, %v700
          %v717 = vpack.c.bf16 %v701, %v701
          %v718 = vpack.c.bf16 %v702, %v702
          %v719 = vpack.c.bf16 %v703, %v703
          %v720 = vpack.c.bf16 %v704, %v704
          %v721 = vpack.c.bf16 %v705, %v705
          %v722 = vpack.c.bf16 %v706, %v706
          %v723 = vpack.c.bf16 %v707, %v707
          %v724 = vpack.c.bf16 %v708, %v708
          %v725 = vpack.c.bf16 %v709, %v709
          %v726 = vpack.c.bf16 %v710, %v710
          %v727 = vpack.c.bf16 %v711, %v711
          %v728 = vpack.c.bf16 %v712, %v712
          %v729 = vpack.c.bf16 %v713, %v713
          %v730 = vpack.c.bf16 %v714, %v714
          %v731 = vpack.c.bf16 %v715, %v715
          %vm732 = vcmask 257024
          %733 = vst.msk [vmem:[%s340] sm:$0xf] %vm732, %v716
          %734 = vst.msk [vmem:[%s340 + $0x4] sm:$0xf] %vm732, %v717
          %735 = vst.msk [vmem:[%s340 + $0x8] sm:$0xf] %vm732, %v718
          %736 = vst.msk [vmem:[%s340 + $0xc] sm:$0xf] %vm732, %v719
          %737 = vst.msk [vmem:[%s340 + $0x10] sm:$0xf] %vm732, %v720
          %738 = vst.msk [vmem:[%s340 + $0x14] sm:$0xf] %vm732, %v721
          %739 = vst.msk [vmem:[%s340 + $0x18] sm:$0xf] %vm732, %v722
          %740 = vst.msk [vmem:[%s340 + $0x1c] sm:$0xf] %vm732, %v723
          %741 = vst.msk [vmem:[%s340 + $0x20] sm:$0xf] %vm732, %v724
          %742 = vst.msk [vmem:[%s340 + $0x24] sm:$0xf] %vm732, %v725
          %743 = vst.msk [vmem:[%s340 + $0x28] sm:$0xf] %vm732, %v726
          %744 = vst.msk [vmem:[%s340 + $0x2c] sm:$0xf] %vm732, %v727
          %745 = vst.msk [vmem:[%s340 + $0x30] sm:$0xf] %vm732, %v728
          %746 = vst.msk [vmem:[%s340 + $0x34] sm:$0xf] %vm732, %v729
          %747 = vst.msk [vmem:[%s340 + $0x38] sm:$0xf] %vm732, %v730
          %748 = vst.msk [vmem:[%s340 + $0x3c] sm:$0xf] %vm732, %v731
        $region85: #{gcn_forward.2} parent=72 // pred_fallthru
          _
        %s749 = smul.u32 16, %s19
        %p750 = scmp.lt.s32.totalorder %s749, 31
        %s751 = scalar_select %p750, %s749, 31
        %s752 = smul.addr %s751, 4
        %s753 = scalar_lea.vmem %s4, %s752
        // Predicated region
        $region86: #{gcn_forward.2} parent=72 // pred_check
          %p754 = pneg %p141
        $region87: #{gcn_forward.2} parent=72 // pred_check_branch
          %756 = sbr.rel (%p754) target = $region89
        $region88: #{gcn_forward.2} parent=72 // pred_region
          %s757 = smul.u32 16, %s19
        $region89: #{gcn_forward.2} parent=72 // pred_fallthru
          _
      $region73: #{gcn_forward.2} parent=5 // pred_fallthru
        _
      %p758 = scmp.le.s32.totalorder 2, %s10
      // Predicated region
      $region90: #{gcn_forward.2} parent=5 // pred_check
        %p759 = pneg %p758
      $region91: #{gcn_forward.2} parent=5 // pred_check_branch
        %761 = sbr.rel (%p759) target = $region93
      $region92: #{gcn_forward.2} parent=5 // pred_region
        %s762 = ssub.s32 %s10, 2
        // Predicated region
        $region94: #{gcn_forward.2} parent=92 // pred_check
          %p763 = pneg %p147
        $region95: #{gcn_forward.2} parent=92 // pred_check_branch
          %765 = sbr.rel (%p763) target = $region97
        $region96: #{gcn_forward.2} parent=92 // pred_region
          %s766 = smul.u32 16, %s21
          %p767 = scmp.lt.s32.totalorder %s766, 31
          %s768 = scalar_select %p767, %s766, 31
          %s769 = smul.addr %s768, 4
          %s770 = scalar_lea.vmem %s4, %s769
        $region97: #{gcn_forward.2} parent=92 // pred_fallthru
          _
      $region93: #{gcn_forward.2} parent=5 // pred_fallthru
        _
    $region6: #{gcn_forward.2} parent=1 // loop_footer
      %s14 = sadd.s32 1, %s10
    $region7: #{gcn_forward.2} parent=1 // loop_footer_branch
      %9 = sbr.rel target = $region3
    $region8: #{gcn_forward.2} parent=1 // loop_exit
      _

// kernel: gcn_forward.3
$region0: #{gcn_forward.3}
  #allocation0 [shape = 'u32[]', space=smem, size = 0x4, offset = 0x4, fixed_abs, tag = 'smem constant byte address 0x4 - core index']
  #allocation1 [shape = 'u32[72,128]{1,0:T(1,128)}', space=vmem, size = 0x9000, scoped, tag = 'internal scratch']
  #allocation2 [shape = 'f32[128,32]{1,0:T(8,128)}', space=vmem, size = 0x10000, scoped, tag = 'scratch operand']
  %s0 = inlined_call_operand.vmem [shape: bf16[256,256], index: 0, kind: input, shape index: {}]
  %s1 = inlined_call_operand.vmem [shape: bf16[256,32], index: 1, kind: input, shape index: {}]
  %s2 = inlined_call_operand.vmem [shape: bf16[32,128], index: 2, kind: input, shape index: {}]
  %s3 = inlined_call_operand.vmem [shape: f32[1,128], index: 3, kind: input, shape index: {}]
  %s4 = inlined_call_operand.vmem [shape: f32[256,128], index: 4, kind: output, shape index: {}]
  %s5 = sld [smem:[#allocation0]]
  $region98: #{gcn_forward.3} parent=0
    _
  %s7 = ssub.s32 1, %s5
  %s8 = scalar_select 0, %s7, %s5
  $region1: #{gcn_forward.3} parent=0
    #allocation3 [shape = 'u8[65536]{0}', space=vmem, size = 0x10000, scoped, tag = 'input window, operand 0']
    loop: start=0, step=1, limit=6
    $region2: #{gcn_forward.3} parent=1 // loop_pre_header
      _
    $region3: #{gcn_forward.3} parent=1 // loop_header
      %s10 = sphi 0, %s14
      %p11 = scmp.ge.s32.totalorder %s10, 6
      %s17 = sphi 0, %s29
      %s18 = sphi 0, %s25
      %s19 = sphi 0, %s17
      %s20 = sphi 0, %s18
      %s21 = sphi 0, %s19
      %s22 = sphi 0, %s20
      %s34 = sphi 0, %s36
      %s37 = sphi 0, %s34
      %s38 = sphi 0, %s37
      %s54 = sphi 0, %s38
      %s60 = sphi 0, %s62
      %s63 = sphi 0, %s60
      %s64 = sphi 0, %s63
      %s80 = sphi 0, %s64
      %s84 = sphi 0, %s84
      %s86 = sphi 0, %s84
      %s87 = sphi 0, %s86
      %s101 = sphi 0, %s87
      %s105 = sphi 0, %s105
      %s107 = sphi 0, %s105
      %s108 = sphi 0, %s107
      %s122 = sphi 0, %s108
      %s128 = sphi 0, %s130
      %s131 = sphi 0, %s128
      %s132 = sphi 0, %s131
      %s148 = sphi 0, %s132
    $region4: #{gcn_forward.3} parent=1 // loop_header_branch
      %13 = sbr.rel (%p11) target = $region8
    $region5: #{gcn_forward.3} parent=1 // loop_body
      %s15 = ssub.s32 %s10, 1
      %s16 = ssub.s32 %s10, 2
      %s23 = sadd.s32 1, %s18
      %p24 = scmp.ge.s32.totalorder %s23, 2
      %s25 = scalar_select %p24, 0, %s23
      %s26 = sadd.s32 1, %s17
      %s27 = scalar_select %p24, %s26, %s17
      %p28 = scmp.ge.s32.totalorder %s27, 2
      %s29 = scalar_select %p28, 0, %s27
      %s30 = ssub.s32 %s17, %s29
      %s31 = ssub.s32 %s18, %s25
      %s32 = sor.u32 %s30, %s31
      %p33 = scmp.eq.s32.totalorder %s32, 0
      %s35 = sadd.s32 %s34, 1
      %s36 = scalar_select %p33, %s34, %s35
      %p39 = pneg %p33
      %p40 = scmp.eq.s32.totalorder %s10, 3
      %p41 = por %p39, %p40
      %p42 = scmp.ne.s32.totalorder %s34, %s37
      %p43 = scmp.eq.s32.totalorder %s10, 0
      %p44 = por %p42, %p43
      %p45 = scmp.ne.s32.totalorder %s34, %s37
      %p46 = scmp.eq.s32.totalorder %s15, 3
      %p47 = por %p45, %p46
      %p48 = scmp.ne.s32.totalorder %s37, %s38
      %p49 = scmp.eq.s32.totalorder %s15, 0
      %p50 = por %p48, %p49
      %p51 = scmp.ne.s32.totalorder %s37, %s38
      %p52 = scmp.eq.s32.totalorder %s16, 3
      %p53 = por %p51, %p52
      %p55 = scmp.ne.s32.totalorder %s38, %s54
      %p56 = scmp.eq.s32.totalorder %s16, 0
      %p57 = por %p55, %p56
      %s58 = ssub.s32 %s18, %s25
      %p59 = scmp.eq.s32.totalorder %s58, 0
      %s61 = sadd.s32 %s60, 1
      %s62 = scalar_select %p59, %s60, %s61
      %p65 = pneg %p59
      %p66 = scmp.eq.s32.totalorder %s10, 3
      %p67 = por %p65, %p66
      %p68 = scmp.ne.s32.totalorder %s60, %s63
      %p69 = scmp.eq.s32.totalorder %s10, 0
      %p70 = por %p68, %p69
      %p71 = scmp.ne.s32.totalorder %s60, %s63
      %p72 = scmp.eq.s32.totalorder %s15, 3
      %p73 = por %p71, %p72
      %p74 = scmp.ne.s32.totalorder %s63, %s64
      %p75 = scmp.eq.s32.totalorder %s15, 0
      %p76 = por %p74, %p75
      %p77 = scmp.ne.s32.totalorder %s63, %s64
      %p78 = scmp.eq.s32.totalorder %s16, 3
      %p79 = por %p77, %p78
      %p81 = scmp.ne.s32.totalorder %s64, %s80
      %p82 = scmp.eq.s32.totalorder %s16, 0
      %p83 = por %p81, %p82
      %s85 = sadd.s32 %s84, 1
      %p88 = scmp.eq.s32.totalorder %s10, 3
      %p89 = scmp.ne.s32.totalorder %s84, %s86
      %p90 = scmp.eq.s32.totalorder %s10, 0
      %p91 = por %p89, %p90
      %p92 = scmp.ne.s32.totalorder %s84, %s86
      %p93 = scmp.eq.s32.totalorder %s15, 3
      %p94 = por %p92, %p93
      %p95 = scmp.ne.s32.totalorder %s86, %s87
      %p96 = scmp.eq.s32.totalorder %s15, 0
      %p97 = por %p95, %p96
      %p98 = scmp.ne.s32.totalorder %s86, %s87
      %p99 = scmp.eq.s32.totalorder %s16, 3
      %p100 = por %p98, %p99
      %p102 = scmp.ne.s32.totalorder %s87, %s101
      %p103 = scmp.eq.s32.totalorder %s16, 0
      %p104 = por %p102, %p103
      %s106 = sadd.s32 %s105, 1
      %p109 = scmp.eq.s32.totalorder %s10, 3
      %p110 = scmp.ne.s32.totalorder %s105, %s107
      %p111 = scmp.eq.s32.totalorder %s10, 0
      %p112 = por %p110, %p111
      %p113 = scmp.ne.s32.totalorder %s105, %s107
      %p114 = scmp.eq.s32.totalorder %s15, 3
      %p115 = por %p113, %p114
      %p116 = scmp.ne.s32.totalorder %s107, %s108
      %p117 = scmp.eq.s32.totalorder %s15, 0
      %p118 = por %p116, %p117
      %p119 = scmp.ne.s32.totalorder %s107, %s108
      %p120 = scmp.eq.s32.totalorder %s16, 3
      %p121 = por %p119, %p120
      %p123 = scmp.ne.s32.totalorder %s108, %s122
      %p124 = scmp.eq.s32.totalorder %s16, 0
      %p125 = por %p123, %p124
      %s126 = ssub.s32 %s17, %s29
      %p127 = scmp.eq.s32.totalorder %s126, 0
      %s129 = sadd.s32 %s128, 1
      %s130 = scalar_select %p127, %s128, %s129
      %p133 = pneg %p127
      %p134 = scmp.eq.s32.totalorder %s10, 3
      %p135 = por %p133, %p134
      %p136 = scmp.ne.s32.totalorder %s128, %s131
      %p137 = scmp.eq.s32.totalorder %s10, 0
      %p138 = por %p136, %p137
      %p139 = scmp.ne.s32.totalorder %s128, %s131
      %p140 = scmp.eq.s32.totalorder %s15, 3
      %p141 = por %p139, %p140
      %p142 = scmp.ne.s32.totalorder %s131, %s132
      %p143 = scmp.eq.s32.totalorder %s15, 0
      %p144 = por %p142, %p143
      %p145 = scmp.ne.s32.totalorder %s131, %s132
      %p146 = scmp.eq.s32.totalorder %s16, 3
      %p147 = por %p145, %p146
      %p149 = scmp.ne.s32.totalorder %s132, %s148
      %p150 = scmp.eq.s32.totalorder %s16, 0
      %p151 = por %p149, %p150
      %p152 = scmp.le.s32.totalorder 1, %s10
      %p153 = scmp.lt.s32.totalorder %s10, 5
      %p154 = pnand %p152, %p153
      %p155 = pneg %p154
      // Predicated region
      $region9: #{gcn_forward.3} parent=5 // pred_check
        _
      $region10: #{gcn_forward.3} parent=5 // pred_check_branch
        %157 = sbr.rel (%p154) target = $region12
      $region11: #{gcn_forward.3} parent=5 // pred_region
        %s158 = ssub.s32 %s10, 1
        // Predicated region
        $region13: #{gcn_forward.3} parent=11 // pred_check
          %p159 = pneg %p97
        $region14: #{gcn_forward.3} parent=11 // pred_check_branch
          %161 = sbr.rel (%p159) target = $region16
        $region15: #{gcn_forward.3} parent=11 // pred_region
          _
        $region16: #{gcn_forward.3} parent=11 // pred_fallthru
          _
        // Predicated region
        $region17: #{gcn_forward.3} parent=11 // pred_check
          %p162 = pneg %p118
        $region18: #{gcn_forward.3} parent=11 // pred_check_branch
          %164 = sbr.rel (%p162) target = $region20
        $region19: #{gcn_forward.3} parent=11 // pred_region
          _
        $region20: #{gcn_forward.3} parent=11 // pred_fallthru
          _
      $region12: #{gcn_forward.3} parent=5 // pred_fallthru
        _
      %p165 = scmp.lt.s32.totalorder %s10, 4
      // Predicated region
      $region21: #{gcn_forward.3} parent=5 // pred_check
        %p166 = pneg %p165
      $region22: #{gcn_forward.3} parent=5 // pred_check_branch
        %168 = sbr.rel (%p166) target = $region24
      $region23: #{gcn_forward.3} parent=5 // pred_region
        // Predicated region
        $region25: #{gcn_forward.3} parent=23 // pred_check
          %p169 = pneg %p44
        $region26: #{gcn_forward.3} parent=23 // pred_check_branch
          %171 = sbr.rel (%p169) target = $region28
        $region27: #{gcn_forward.3} parent=23 // pred_region
          %s172 = sand.u32 %s34, 1
          %s173 = sand.u32 %s34, 1
          %s174 = smul.addr %s173, 64
          %s175 = scalar_lea.vmem [#allocation3], %s174
          %s176 = smul.u32 16, %s17
          %s177 = smul.addr %s176, 2
          %s178 = sadd.s32 %s18, %s177
          %s179 = smul.addr %s178, 4
          %s180 = scalar_lea.vmem %s0, %s179
          // Predicated region
          $region29: #{gcn_forward.3} parent=27 // pred_check
            _
          $region30: #{gcn_forward.3} parent=27 // pred_check_branch
            %182 = sbr.rel (0) target = $region32
          $region31: #{gcn_forward.3} parent=27 // pred_region
            // Predicated region
            $region33: #{gcn_forward.3} parent=31 // pred_check
              _
            $region34: #{gcn_forward.3} parent=31 // pred_check_branch
              %184 = sbr.rel target = $region36
            $region35: #{gcn_forward.3} parent=31 // pred_region
              // Predicated region
              $region48: #{gcn_forward.3} parent=35 // pred_check
                _
              $region49: #{gcn_forward.3} parent=35 // pred_check_branch
                %230 = sbr.rel (0) target = $region51
              $region50: #{gcn_forward.3} parent=35 // pred_region
                loop: start=0, step=1, limit=1
                $region52: #{gcn_forward.3} parent=50 // loop_pre_header
                  _
                $region53: #{gcn_forward.3} parent=50 // loop_header
                  %s232 = sphi 0, %s236
                  %p233 = scmp.ge.s32.totalorder %s232, 1
                  %s237 = sphi %s180, %s180
                  %s238 = sphi %s175, %s175
                $region54: #{gcn_forward.3} parent=50 // loop_header_branch
                  %235 = sbr.rel (%p233) target = $region58
                $region55: #{gcn_forward.3} parent=50 // loop_body
                  _
                $region56: #{gcn_forward.3} parent=50 // loop_footer
                  %s236 = sadd.s32 1, %s232
                $region57: #{gcn_forward.3} parent=50 // loop_footer_branch
                  %231 = sbr.rel target = $region53
                $region58: #{gcn_forward.3} parent=50 // loop_exit
                  _
                %s240 = ssub.s32 16, 1
                loop: start=0, step=1, limit=1
                $region59: #{gcn_forward.3} parent=50 // loop_pre_header
                  _
                $region60: #{gcn_forward.3} parent=50 // loop_header
                  %s242 = sphi 0, %s246
                  %p243 = scmp.ge.s32.totalorder %s242, 1
                  %s247 = sphi %s180, %s180
                  %s248 = sphi %s175, %s175
                $region61: #{gcn_forward.3} parent=50 // loop_header_branch
                  %245 = sbr.rel (%p243) target = $region65
                $region62: #{gcn_forward.3} parent=50 // loop_body
                  %v249 = vld [vmem:[%s247] sm:%s240]
                  %250 = vst [vmem:[%s248] sm:%s240] %v249
                  %v251 = vld [vmem:[%s247 + $0x8] sm:%s240]
                  %252 = vst [vmem:[%s248 + $0x4] sm:%s240] %v251
                  %v253 = vld [vmem:[%s247 + $0x10] sm:%s240]
                  %254 = vst [vmem:[%s248 + $0x8] sm:%s240] %v253
                  %v255 = vld [vmem:[%s247 + $0x18] sm:%s240]
                  %256 = vst [vmem:[%s248 + $0xc] sm:%s240] %v255
                  %v257 = vld [vmem:[%s247 + $0x20] sm:%s240]
                  %258 = vst [vmem:[%s248 + $0x10] sm:%s240] %v257
                  %v259 = vld [vmem:[%s247 + $0x28] sm:%s240]
                  %260 = vst [vmem:[%s248 + $0x14] sm:%s240] %v259
                  %v261 = vld [vmem:[%s247 + $0x30] sm:%s240]
                  %262 = vst [vmem:[%s248 + $0x18] sm:%s240] %v261
                  %v263 = vld [vmem:[%s247 + $0x38] sm:%s240]
                  %264 = vst [vmem:[%s248 + $0x1c] sm:%s240] %v263
                  %v265 = vld [vmem:[%s247 + $0x40] sm:%s240]
                  %266 = vst [vmem:[%s248 + $0x20] sm:%s240] %v265
                  %v267 = vld [vmem:[%s247 + $0x48] sm:%s240]
                  %268 = vst [vmem:[%s248 + $0x24] sm:%s240] %v267
                  %v269 = vld [vmem:[%s247 + $0x50] sm:%s240]
                  %270 = vst [vmem:[%s248 + $0x28] sm:%s240] %v269
                  %v271 = vld [vmem:[%s247 + $0x58] sm:%s240]
                  %272 = vst [vmem:[%s248 + $0x2c] sm:%s240] %v271
                  %v273 = vld [vmem:[%s247 + $0x60] sm:%s240]
                  %274 = vst [vmem:[%s248 + $0x30] sm:%s240] %v273
                  %v275 = vld [vmem:[%s247 + $0x68] sm:%s240]
                  %276 = vst [vmem:[%s248 + $0x34] sm:%s240] %v275
                  %v277 = vld [vmem:[%s247 + $0x70] sm:%s240]
                  %278 = vst [vmem:[%s248 + $0x38] sm:%s240] %v277
                  %v279 = vld [vmem:[%s247 + $0x78] sm:%s240]
                  %280 = vst [vmem:[%s248 + $0x3c] sm:%s240] %v279
                $region63: #{gcn_forward.3} parent=50 // loop_footer
                  %s246 = sadd.s32 1, %s242
                $region64: #{gcn_forward.3} parent=50 // loop_footer_branch
                  %241 = sbr.rel target = $region60
                $region65: #{gcn_forward.3} parent=50 // loop_exit
                  _
              $region51: #{gcn_forward.3} parent=35 // pred_fallthru
                _
            $region36: #{gcn_forward.3} parent=31 // pred_fallthru
              _
            // Predicated region
            $region37: #{gcn_forward.3} parent=31 // pred_check
              _
            $region38: #{gcn_forward.3} parent=31 // pred_check_branch
              %186 = sbr.rel (0) target = $region40
            $region39: #{gcn_forward.3} parent=31 // pred_region
              %s188 = ssub.s32 16, 1
              loop: start=0, step=1, limit=1
              $region41: #{gcn_forward.3} parent=39 // loop_pre_header
                _
              $region42: #{gcn_forward.3} parent=39 // loop_header
                %s190 = sphi 0, %s194
                %p191 = scmp.ge.s32.totalorder %s190, 1
                %s195 = sphi %s180, %s180
                %s196 = sphi %s175, %s175
              $region43: #{gcn_forward.3} parent=39 // loop_header_branch
                %193 = sbr.rel (%p191) target = $region47
              $region44: #{gcn_forward.3} parent=39 // loop_body
                %v197 = vld [vmem:[%s195] sm:%s188]
                %198 = vst [vmem:[%s196] sm:%s188] %v197
                %v199 = vld [vmem:[%s195 + $0x8] sm:%s188]
                %200 = vst [vmem:[%s196 + $0x4] sm:%s188] %v199
                %v201 = vld [vmem:[%s195 + $0x10] sm:%s188]
                %202 = vst [vmem:[%s196 + $0x8] sm:%s188] %v201
                %v203 = vld [vmem:[%s195 + $0x18] sm:%s188]
                %204 = vst [vmem:[%s196 + $0xc] sm:%s188] %v203
                %v205 = vld [vmem:[%s195 + $0x20] sm:%s188]
                %206 = vst [vmem:[%s196 + $0x10] sm:%s188] %v205
                %v207 = vld [vmem:[%s195 + $0x28] sm:%s188]
                %208 = vst [vmem:[%s196 + $0x14] sm:%s188] %v207
                %v209 = vld [vmem:[%s195 + $0x30] sm:%s188]
                %210 = vst [vmem:[%s196 + $0x18] sm:%s188] %v209
                %v211 = vld [vmem:[%s195 + $0x38] sm:%s188]
                %212 = vst [vmem:[%s196 + $0x1c] sm:%s188] %v211
                %v213 = vld [vmem:[%s195 + $0x40] sm:%s188]
                %214 = vst [vmem:[%s196 + $0x20] sm:%s188] %v213
                %v215 = vld [vmem:[%s195 + $0x48] sm:%s188]
                %216 = vst [vmem:[%s196 + $0x24] sm:%s188] %v215
                %v217 = vld [vmem:[%s195 + $0x50] sm:%s188]
                %218 = vst [vmem:[%s196 + $0x28] sm:%s188] %v217
                %v219 = vld [vmem:[%s195 + $0x58] sm:%s188]
                %220 = vst [vmem:[%s196 + $0x2c] sm:%s188] %v219
                %v221 = vld [vmem:[%s195 + $0x60] sm:%s188]
                %222 = vst [vmem:[%s196 + $0x30] sm:%s188] %v221
                %v223 = vld [vmem:[%s195 + $0x68] sm:%s188]
                %224 = vst [vmem:[%s196 + $0x34] sm:%s188] %v223
                %v225 = vld [vmem:[%s195 + $0x70] sm:%s188]
                %226 = vst [vmem:[%s196 + $0x38] sm:%s188] %v225
                %v227 = vld [vmem:[%s195 + $0x78] sm:%s188]
                %228 = vst [vmem:[%s196 + $0x3c] sm:%s188] %v227
              $region45: #{gcn_forward.3} parent=39 // loop_footer
                %s194 = sadd.s32 1, %s190
              $region46: #{gcn_forward.3} parent=39 // loop_footer_branch
                %189 = sbr.rel target = $region42
              $region47: #{gcn_forward.3} parent=39 // loop_exit
                _
            $region40: #{gcn_forward.3} parent=31 // pred_fallthru
              _
          $region32: #{gcn_forward.3} parent=27 // pred_fallthru
            _
          %281 = vnop
        $region28: #{gcn_forward.3} parent=23 // pred_fallthru
          _
        // Predicated region
        $region66: #{gcn_forward.3} parent=23 // pred_check
          %p282 = pneg %p70
        $region67: #{gcn_forward.3} parent=23 // pred_check_branch
          %284 = sbr.rel (%p282) target = $region69
        $region68: #{gcn_forward.3} parent=23 // pred_region
          %s285 = smul.u32 16, %s18
          %p286 = scmp.lt.s32.totalorder %s285, 31
          %s287 = scalar_select %p286, %s285, 31
          %s288 = smul.addr %s287, 4
          %s289 = scalar_lea.vmem %s1, %s288
          %s290 = smul.u32 16, %s18
        $region69: #{gcn_forward.3} parent=23 // pred_fallthru
          _
      $region24: #{gcn_forward.3} parent=5 // pred_fallthru
        _
      %p291 = scmp.le.s32.totalorder 1, %s10
      %p292 = scmp.lt.s32.totalorder %s10, 5
      %p293 = pnand %p291, %p292
      %p294 = pneg %p293
      // Predicated region
      $region70: #{gcn_forward.3} parent=5 // pred_check
        _
      $region71: #{gcn_forward.3} parent=5 // pred_check_branch
        %296 = sbr.rel (%p293) target = $region73
      $region72: #{gcn_forward.3} parent=5 // pred_region
        %s297 = ssub.s32 %s10, 1
        %s298 = sand.u32 %s37, 1
        %s299 = sand.u32 %s37, 1
        %s300 = smul.addr %s299, 64
        %s301 = scalar_lea.vmem [#allocation3], %s300
        // Predicated region
        $region74: #{gcn_forward.3} parent=72 // pred_check
          %p302 = pneg %p50
        $region75: #{gcn_forward.3} parent=72 // pred_check_branch
          %304 = sbr.rel (%p302) target = $region77
        $region76: #{gcn_forward.3} parent=72 // pred_region
          _
        $region77: #{gcn_forward.3} parent=72 // pred_fallthru
          _
        %s305 = sand.u32 %s37, 1
        %s306 = sand.u32 %s37, 1
        %s307 = smul.addr %s306, 64
        %s308 = scalar_lea.vmem [#allocation3], %s307
        %p309 = pneg %p50
        %p310 = pneg %p47
        %s311 = smul.u32 16, %s20
        %p312 = scmp.lt.s32.totalorder %s311, 31
        %s313 = scalar_select %p312, %s311, 31
        %s314 = smul.addr %s313, 4
        %s315 = scalar_lea.vmem %s1, %s314
        %p316 = pneg %p76
        %p317 = pneg %p73
        %p318 = pneg %p97
        %p319 = pneg %p94
        %p320 = pneg %p118
        %p321 = pneg %p115
        %p322 = pneg %p144
        %p323 = pneg %p141
        %s324 = smul.u32 16, %s19
        %p325 = scmp.lt.s32.totalorder %s324, 31
        %s326 = scalar_select %p325, %s324, 31
        %s327 = smul.addr %s326, 8
        %s328 = scalar_lea.vmem %s4, %s327
        %s329 = smul.u32 16, %s19
        %s330 = smul.u32 16, %s20
        %p331 = scmp.lt.s32.totalorder %s330, 31
        %s332 = scalar_select %p331, %s330, 31
        %s333 = smul.addr %s332, 4
        %s334 = scalar_lea.vmem %s1, %s333
        %s335 = smul.u32 16, %s20
        %s336 = smul.u32 16, %s19
        %p337 = scmp.lt.s32.totalorder %s336, 31
        %s338 = scalar_select %p337, %s336, 31
        %s339 = smul.addr %s338, 8
        %s340 = scalar_lea.vmem %s4, %s339
        %s341 = smul.u32 16, %s19
        %p343 = scmp.eq.s32.totalorder %s20, 0
        // Predicated region
        $region78: #{gcn_forward.3} parent=72 // pred_check
          %p344 = pneg %p343
        $region79: #{gcn_forward.3} parent=72 // pred_check_branch
          %346 = sbr.rel (%p344) target = $region81
        $region80: #{gcn_forward.3} parent=72 // pred_region
          %vm347 = vcmask 261120
          %348 = vst.msk [vmem:[#allocation2] sm:$0xff] %vm347, 0.0
          %349 = vst.msk [vmem:[#allocation2 + $0x8] sm:$0xff] %vm347, 0.0
          %350 = vst.msk [vmem:[#allocation2 + $0x10] sm:$0xff] %vm347, 0.0
          %351 = vst.msk [vmem:[#allocation2 + $0x18] sm:$0xff] %vm347, 0.0
          %352 = vst.msk [vmem:[#allocation2 + $0x20] sm:$0xff] %vm347, 0.0
          %353 = vst.msk [vmem:[#allocation2 + $0x28] sm:$0xff] %vm347, 0.0
          %354 = vst.msk [vmem:[#allocation2 + $0x30] sm:$0xff] %vm347, 0.0
          %355 = vst.msk [vmem:[#allocation2 + $0x38] sm:$0xff] %vm347, 0.0
          %356 = vst.msk [vmem:[#allocation2 + $0x40] sm:$0xff] %vm347, 0.0
          %357 = vst.msk [vmem:[#allocation2 + $0x48] sm:$0xff] %vm347, 0.0
          %358 = vst.msk [vmem:[#allocation2 + $0x50] sm:$0xff] %vm347, 0.0
          %359 = vst.msk [vmem:[#allocation2 + $0x58] sm:$0xff] %vm347, 0.0
          %360 = vst.msk [vmem:[#allocation2 + $0x60] sm:$0xff] %vm347, 0.0
          %361 = vst.msk [vmem:[#allocation2 + $0x68] sm:$0xff] %vm347, 0.0
          %362 = vst.msk [vmem:[#allocation2 + $0x70] sm:$0xff] %vm347, 0.0
          %363 = vst.msk [vmem:[#allocation2 + $0x78] sm:$0xff] %vm347, 0.0
        $region81: #{gcn_forward.3} parent=72 // pred_fallthru
          _
        %v364 = vld [vmem:[#allocation2] sm:$0xff]
        %v365 = vld [vmem:[#allocation2 + $0x8] sm:$0xff]
        %v366 = vld [vmem:[#allocation2 + $0x10] sm:$0xff]
        %v367 = vld [vmem:[#allocation2 + $0x18] sm:$0xff]
        %v368 = vld [vmem:[#allocation2 + $0x20] sm:$0xff]
        %v369 = vld [vmem:[#allocation2 + $0x28] sm:$0xff]
        %v370 = vld [vmem:[#allocation2 + $0x30] sm:$0xff]
        %v371 = vld [vmem:[#allocation2 + $0x38] sm:$0xff]
        %v372 = vld [vmem:[#allocation2 + $0x40] sm:$0xff]
        %v373 = vld [vmem:[#allocation2 + $0x48] sm:$0xff]
        %v374 = vld [vmem:[#allocation2 + $0x50] sm:$0xff]
        %v375 = vld [vmem:[#allocation2 + $0x58] sm:$0xff]
        %v376 = vld [vmem:[#allocation2 + $0x60] sm:$0xff]
        %v377 = vld [vmem:[#allocation2 + $0x68] sm:$0xff]
        %v378 = vld [vmem:[#allocation2 + $0x70] sm:$0xff]
        %v379 = vld [vmem:[#allocation2 + $0x78] sm:$0xff]
        %v380 = vld [vmem:[%s301] sm:$0xf]
        %v381 = vld [vmem:[%s301 + $0x4] sm:$0xf]
        %v382 = vld [vmem:[%s301 + $0x8] sm:$0xf]
        %v383 = vld [vmem:[%s301 + $0xc] sm:$0xf]
        %v384 = vld [vmem:[%s301 + $0x10] sm:$0xf]
        %v385 = vld [vmem:[%s301 + $0x14] sm:$0xf]
        %v386 = vld [vmem:[%s301 + $0x18] sm:$0xf]
        %v387 = vld [vmem:[%s301 + $0x1c] sm:$0xf]
        %v388 = vld [vmem:[%s301 + $0x20] sm:$0xf]
        %v389 = vld [vmem:[%s301 + $0x24] sm:$0xf]
        %v390 = vld [vmem:[%s301 + $0x28] sm:$0xf]
        %v391 = vld [vmem:[%s301 + $0x2c] sm:$0xf]
        %v392 = vld [vmem:[%s301 + $0x30] sm:$0xf]
        %v393 = vld [vmem:[%s301 + $0x34] sm:$0xf]
        %v394 = vld [vmem:[%s301 + $0x38] sm:$0xf]
        %v395 = vld [vmem:[%s301 + $0x3c] sm:$0xf]
        %v396 = vld [vmem:[%s334] sm:$0xf]
        %v397 = vld [vmem:[%s334 + $0x4] sm:$0xf]
        %v398 = vld [vmem:[%s334 + $0x8] sm:$0xf]
        %v399 = vld [vmem:[%s334 + $0xc] sm:$0xf]
        %v400 = vld [vmem:[%s334 + $0x10] sm:$0xf]
        %v401 = vld [vmem:[%s334 + $0x14] sm:$0xf]
        %v402 = vld [vmem:[%s334 + $0x18] sm:$0xf]
        %v403 = vld [vmem:[%s334 + $0x1c] sm:$0xf]
        %v404 = vld [vmem:[%s334 + $0x20] sm:$0xf]
        %v405 = vld [vmem:[%s334 + $0x24] sm:$0xf]
        %v406 = vld [vmem:[%s334 + $0x28] sm:$0xf]
        %v407 = vld [vmem:[%s334 + $0x2c] sm:$0xf]
        %v408 = vld [vmem:[%s334 + $0x30] sm:$0xf]
        %v409 = vld [vmem:[%s334 + $0x34] sm:$0xf]
        %v410 = vld [vmem:[%s334 + $0x38] sm:$0xf]
        %v411 = vld [vmem:[%s334 + $0x3c] sm:$0xf]
        %v428 = vunpack.c.l.b16 %v380
        %v429 = vunpack.c.l.b16 %v381
        %v430 = vunpack.c.l.b16 %v382
        %v431 = vunpack.c.l.b16 %v383
        %v432 = vunpack.c.l.b16 %v384
        %v433 = vunpack.c.l.b16 %v385
        %v434 = vunpack.c.l.b16 %v386
        %v435 = vunpack.c.l.b16 %v387
        %v436 = vunpack.c.l.b16 %v388
        %v437 = vunpack.c.l.b16 %v389
        %v438 = vunpack.c.l.b16 %v390
        %v439 = vunpack.c.l.b16 %v391
        %v440 = vunpack.c.l.b16 %v392
        %v441 = vunpack.c.l.b16 %v393
        %v442 = vunpack.c.l.b16 %v394
        %v443 = vunpack.c.l.b16 %v395
        %v444 = vpack.c.b16 %v429, %v428
        %v445 = vpack.c.b16 %v431, %v430
        %v446 = vpack.c.b16 %v433, %v432
        %v447 = vpack.c.b16 %v435, %v434
        %v448 = vpack.c.b16 %v437, %v436
        %v449 = vpack.c.b16 %v439, %v438
        %v450 = vpack.c.b16 %v441, %v440
        %v451 = vpack.c.b16 %v443, %v442
        %v476 = vunpack.c.l.b16 %v396
        %v477 = vunpack.c.l.b16 %v397
        %v478 = vunpack.c.l.b16 %v398
        %v479 = vunpack.c.l.b16 %v399
        %v480 = vunpack.c.l.b16 %v400
        %v481 = vunpack.c.l.b16 %v401
        %v482 = vunpack.c.l.b16 %v402
        %v483 = vunpack.c.l.b16 %v403
        %v484 = vunpack.c.l.b16 %v404
        %v485 = vunpack.c.l.b16 %v405
        %v486 = vunpack.c.l.b16 %v406
        %v487 = vunpack.c.l.b16 %v407
        %v488 = vunpack.c.l.b16 %v408
        %v489 = vunpack.c.l.b16 %v409
        %v490 = vunpack.c.l.b16 %v410
        %v491 = vunpack.c.l.b16 %v411
        %v492 = vpack.c.b16 %v477, %v476
        %v493 = vpack.c.b16 %v479, %v478
        %v494 = vpack.c.b16 %v481, %v480
        %v495 = vpack.c.b16 %v483, %v482
        %v496 = vpack.c.b16 %v485, %v484
        %v497 = vpack.c.b16 %v487, %v486
        %v498 = vpack.c.b16 %v489, %v488
        %v499 = vpack.c.b16 %v491, %v490
        %508 = vmatpush.bf16.msra.mxu0 %v499
        %509 = vmatpush.bf16.msra.mxu0 %v498
        %510 = vmatpush.bf16.msra.mxu0 %v497
        %511 = vmatpush.bf16.msra.mxu0 %v496
        %512 = vmatpush.bf16.msra.mxu0 %v495
        %513 = vmatpush.bf16.msra.mxu0 %v494
        %514 = vmatpush.bf16.msra.mxu0 %v493
        %515 = vmatpush.bf16.msra.mxu0 %v492
        %516 = vmatmul.bf16.gmra.mxu0 %v444
        %v517 = vpop.f32.mrf.mxu0
        %v518 = vadd.f32 0.0, %v517
        %v519 = vpop.f32.mrf.mxu0
        %v520 = vadd.f32 0.0, %v519
        %521 = vmatmul.bf16.gmra.mxu0 %v445
        %v522 = vpop.f32.mrf.mxu0
        %v523 = vadd.f32 0.0, %v522
        %v524 = vpop.f32.mrf.mxu0
        %v525 = vadd.f32 0.0, %v524
        %526 = vmatmul.bf16.gmra.mxu0 %v446
        %v527 = vpop.f32.mrf.mxu0
        %v528 = vadd.f32 0.0, %v527
        %v529 = vpop.f32.mrf.mxu0
        %v530 = vadd.f32 0.0, %v529
        %531 = vmatmul.bf16.gmra.mxu0 %v447
        %v532 = vpop.f32.mrf.mxu0
        %v533 = vadd.f32 0.0, %v532
        %v534 = vpop.f32.mrf.mxu0
        %v535 = vadd.f32 0.0, %v534
        %536 = vmatmul.bf16.gmra.mxu0 %v448
        %v537 = vpop.f32.mrf.mxu0
        %v538 = vadd.f32 0.0, %v537
        %v539 = vpop.f32.mrf.mxu0
        %v540 = vadd.f32 0.0, %v539
        %541 = vmatmul.bf16.gmra.mxu0 %v449
        %v542 = vpop.f32.mrf.mxu0
        %v543 = vadd.f32 0.0, %v542
        %v544 = vpop.f32.mrf.mxu0
        %v545 = vadd.f32 0.0, %v544
        %546 = vmatmul.bf16.gmra.mxu0 %v450
        %v547 = vpop.f32.mrf.mxu0
        %v548 = vadd.f32 0.0, %v547
        %v549 = vpop.f32.mrf.mxu0
        %v550 = vadd.f32 0.0, %v549
        %551 = vmatmul.bf16.gmra.mxu0 %v451
        %v552 = vpop.f32.mrf.mxu0
        %v553 = vadd.f32 0.0, %v552
        %v554 = vpop.f32.mrf.mxu0
        %v555 = vadd.f32 0.0, %v554
        %556 = vdwg.mxu0
        %v557 = vadd.f32 %v364, %v518
        %v558 = vadd.f32 %v365, %v520
        %v559 = vadd.f32 %v366, %v523
        %v560 = vadd.f32 %v367, %v525
        %v561 = vadd.f32 %v368, %v528
        %v562 = vadd.f32 %v369, %v530
        %v563 = vadd.f32 %v370, %v533
        %v564 = vadd.f32 %v371, %v535
        %v565 = vadd.f32 %v372, %v538
        %v566 = vadd.f32 %v373, %v540
        %v567 = vadd.f32 %v374, %v543
        %v568 = vadd.f32 %v375, %v545
        %v569 = vadd.f32 %v376, %v548
        %v570 = vadd.f32 %v377, %v550
        %v571 = vadd.f32 %v378, %v553
        %v572 = vadd.f32 %v379, %v555
        %vm573 = vcmask 261120
        %574 = vst.msk [vmem:[#allocation2] sm:$0xff] %vm573, %v557
        %575 = vst.msk [vmem:[#allocation2 + $0x8] sm:$0xff] %vm573, %v558
        %576 = vst.msk [vmem:[#allocation2 + $0x10] sm:$0xff] %vm573, %v559
        %577 = vst.msk [vmem:[#allocation2 + $0x18] sm:$0xff] %vm573, %v560
        %578 = vst.msk [vmem:[#allocation2 + $0x20] sm:$0xff] %vm573, %v561
        %579 = vst.msk [vmem:[#allocation2 + $0x28] sm:$0xff] %vm573, %v562
        %580 = vst.msk [vmem:[#allocation2 + $0x30] sm:$0xff] %vm573, %v563
        %581 = vst.msk [vmem:[#allocation2 + $0x38] sm:$0xff] %vm573, %v564
        %582 = vst.msk [vmem:[#allocation2 + $0x40] sm:$0xff] %vm573, %v565
        %583 = vst.msk [vmem:[#allocation2 + $0x48] sm:$0xff] %vm573, %v566
        %584 = vst.msk [vmem:[#allocation2 + $0x50] sm:$0xff] %vm573, %v567
        %585 = vst.msk [vmem:[#allocation2 + $0x58] sm:$0xff] %vm573, %v568
        %586 = vst.msk [vmem:[#allocation2 + $0x60] sm:$0xff] %vm573, %v569
        %587 = vst.msk [vmem:[#allocation2 + $0x68] sm:$0xff] %vm573, %v570
        %588 = vst.msk [vmem:[#allocation2 + $0x70] sm:$0xff] %vm573, %v571
        %589 = vst.msk [vmem:[#allocation2 + $0x78] sm:$0xff] %vm573, %v572
        %p590 = scmp.eq.s32.totalorder %s20, 1
        // Predicated region
        $region82: #{gcn_forward.3} parent=72 // pred_check
          %p591 = pneg %p590
        $region83: #{gcn_forward.3} parent=72 // pred_check_branch
          %593 = sbr.rel (%p591) target = $region85
        $region84: #{gcn_forward.3} parent=72 // pred_region
          %v594 = vld [vmem:[#allocation2] sm:$0xff]
          %v595 = vld [vmem:[#allocation2 + $0x8] sm:$0xff]
          %v596 = vld [vmem:[#allocation2 + $0x10] sm:$0xff]
          %v597 = vld [vmem:[#allocation2 + $0x18] sm:$0xff]
          %v598 = vld [vmem:[#allocation2 + $0x20] sm:$0xff]
          %v599 = vld [vmem:[#allocation2 + $0x28] sm:$0xff]
          %v600 = vld [vmem:[#allocation2 + $0x30] sm:$0xff]
          %v601 = vld [vmem:[#allocation2 + $0x38] sm:$0xff]
          %v602 = vld [vmem:[#allocation2 + $0x40] sm:$0xff]
          %v603 = vld [vmem:[#allocation2 + $0x48] sm:$0xff]
          %v604 = vld [vmem:[#allocation2 + $0x50] sm:$0xff]
          %v605 = vld [vmem:[#allocation2 + $0x58] sm:$0xff]
          %v606 = vld [vmem:[#allocation2 + $0x60] sm:$0xff]
          %v607 = vld [vmem:[#allocation2 + $0x68] sm:$0xff]
          %v608 = vld [vmem:[#allocation2 + $0x70] sm:$0xff]
          %v609 = vld [vmem:[#allocation2 + $0x78] sm:$0xff]
          %v610 = vpack.c.bf16 %v595, %v594
          %v611 = vpack.c.bf16 %v597, %v596
          %v612 = vpack.c.bf16 %v599, %v598
          %v613 = vpack.c.bf16 %v601, %v600
          %v614 = vpack.c.bf16 %v603, %v602
          %v615 = vpack.c.bf16 %v605, %v604
          %v616 = vpack.c.bf16 %v607, %v606
          %v617 = vpack.c.bf16 %v609, %v608
          %v618 = vld [vmem:[%s2] sm:$0xf]
          %v619 = vld [vmem:[%s2 + $0x4] sm:$0xf]
          %v620 = vld [vmem:[%s2 + $0x8] sm:$0xf]
          %v621 = vld [vmem:[%s2 + $0xc] sm:$0xf]
          %v622 = vld [vmem:[%s3] sm:$0x1]
          %v624 = vperm.slane %v622, 0
          %v630 = vunpack.c.l.b16 %v618
          %v631 = vunpack.c.l.b16 %v619
          %v632 = vunpack.c.l.b16 %v620
          %v633 = vunpack.c.l.b16 %v621
          %v634 = vpack.c.b16 %v631, %v630
          %v635 = vpack.c.b16 %v633, %v632
          %v639 = vsel %vm573, %v610, 0
          %v642 = vsel %vm573, %v611, 0
          %v645 = vsel %vm573, %v612, 0
          %v648 = vsel %vm573, %v613, 0
          %v651 = vsel %vm573, %v614, 0
          %v654 = vsel %vm573, %v615, 0
          %v657 = vsel %vm573, %v616, 0
          %v660 = vsel %vm573, %v617, 0
          %662 = vmatpush.bf16.msra.mxu0 0
          %663 = vmatpush.bf16.msra.mxu0 0
          %664 = vmatpush.bf16.msra.mxu0 0
          %665 = vmatpush.bf16.msra.mxu0 0
          %666 = vmatpush.bf16.msra.mxu0 0
          %667 = vmatpush.bf16.msra.mxu0 0
          %668 = vmatpush.bf16.msra.mxu0 %v635
          %669 = vmatpush.bf16.msra.mxu0 %v634
          %670 = vmatmul.bf16.gmra.mxu0 %v639
          %v671 = vpop.f32.mrf.mxu0
          %v672 = vadd.f32 %v624, %v671
          %v673 = vpop.f32.mrf.mxu0
          %v674 = vadd.f32 %v624, %v673
          %675 = vmatmul.bf16.gmra.mxu0 %v642
          %v676 = vpop.f32.mrf.mxu0
          %v677 = vadd.f32 %v624, %v676
          %v678 = vpop.f32.mrf.mxu0
          %v679 = vadd.f32 %v624, %v678
          %680 = vmatmul.bf16.gmra.mxu0 %v645
          %v681 = vpop.f32.mrf.mxu0
          %v682 = vadd.f32 %v624, %v681
          %v683 = vpop.f32.mrf.mxu0
          %v684 = vadd.f32 %v624, %v683
          %685 = vmatmul.bf16.gmra.mxu0 %v648
          %v686 = vpop.f32.mrf.mxu0
          %v687 = vadd.f32 %v624, %v686
          %v688 = vpop.f32.mrf.mxu0
          %v689 = vadd.f32 %v624, %v688
          %690 = vmatmul.bf16.gmra.mxu0 %v651
          %v691 = vpop.f32.mrf.mxu0
          %v692 = vadd.f32 %v624, %v691
          %v693 = vpop.f32.mrf.mxu0
          %v694 = vadd.f32 %v624, %v693
          %695 = vmatmul.bf16.gmra.mxu0 %v654
          %v696 = vpop.f32.mrf.mxu0
          %v697 = vadd.f32 %v624, %v696
          %v698 = vpop.f32.mrf.mxu0
          %v699 = vadd.f32 %v624, %v698
          %700 = vmatmul.bf16.gmra.mxu0 %v657
          %v701 = vpop.f32.mrf.mxu0
          %v702 = vadd.f32 %v624, %v701
          %v703 = vpop.f32.mrf.mxu0
          %v704 = vadd.f32 %v624, %v703
          %705 = vmatmul.bf16.gmra.mxu0 %v660
          %v706 = vpop.f32.mrf.mxu0
          %v707 = vadd.f32 %v624, %v706
          %v708 = vpop.f32.mrf.mxu0
          %v709 = vadd.f32 %v624, %v708
          %710 = vdwg.mxu0
          %711 = vmax.xlane.f32.xlu0 %v672
          %v712 = vpop.xlane.xlu0 %711
          %713 = vmax.xlane.f32.xlu0 %v674
          %v714 = vpop.xlane.xlu0 %713
          %715 = vmax.xlane.f32.xlu0 %v677
          %v716 = vpop.xlane.xlu0 %715
          %717 = vmax.xlane.f32.xlu0 %v679
          %v718 = vpop.xlane.xlu0 %717
          %719 = vmax.xlane.f32.xlu0 %v682
          %v720 = vpop.xlane.xlu0 %719
          %721 = vmax.xlane.f32.xlu0 %v684
          %v722 = vpop.xlane.xlu0 %721
          %723 = vmax.xlane.f32.xlu0 %v687
          %v724 = vpop.xlane.xlu0 %723
          %725 = vmax.xlane.f32.xlu0 %v689
          %v726 = vpop.xlane.xlu0 %725
          %727 = vmax.xlane.f32.xlu0 %v692
          %v728 = vpop.xlane.xlu0 %727
          %729 = vmax.xlane.f32.xlu0 %v694
          %v730 = vpop.xlane.xlu0 %729
          %731 = vmax.xlane.f32.xlu0 %v697
          %v732 = vpop.xlane.xlu0 %731
          %733 = vmax.xlane.f32.xlu0 %v699
          %v734 = vpop.xlane.xlu0 %733
          %735 = vmax.xlane.f32.xlu0 %v702
          %v736 = vpop.xlane.xlu0 %735
          %737 = vmax.xlane.f32.xlu0 %v704
          %v738 = vpop.xlane.xlu0 %737
          %739 = vmax.xlane.f32.xlu0 %v707
          %v740 = vpop.xlane.xlu0 %739
          %741 = vmax.xlane.f32.xlu0 %v709
          %v742 = vpop.xlane.xlu0 %741
          %v743 = vsub.f32 %v672, %v712
          %v744 = vsub.f32 %v674, %v714
          %v745 = vsub.f32 %v677, %v716
          %v746 = vsub.f32 %v679, %v718
          %v747 = vsub.f32 %v682, %v720
          %v748 = vsub.f32 %v684, %v722
          %v749 = vsub.f32 %v687, %v724
          %v750 = vsub.f32 %v689, %v726
          %v751 = vsub.f32 %v692, %v728
          %v752 = vsub.f32 %v694, %v730
          %v753 = vsub.f32 %v697, %v732
          %v754 = vsub.f32 %v699, %v734
          %v755 = vsub.f32 %v702, %v736
          %v756 = vsub.f32 %v704, %v738
          %v757 = vsub.f32 %v707, %v740
          %v758 = vsub.f32 %v709, %v742
          %v759 = vmul.f32 %v743, 1.442695
          %v760 = vpow.pop %v759
          %v761 = vmul.f32 %v744, 1.442695
          %v762 = vpow.pop %v761
          %v763 = vmul.f32 %v745, 1.442695
          %v764 = vpow.pop %v763
          %v765 = vmul.f32 %v746, 1.442695
          %v766 = vpow.pop %v765
          %v767 = vmul.f32 %v747, 1.442695
          %v768 = vpow.pop %v767
          %v769 = vmul.f32 %v748, 1.442695
          %v770 = vpow.pop %v769
          %v771 = vmul.f32 %v749, 1.442695
          %v772 = vpow.pop %v771
          %v773 = vmul.f32 %v750, 1.442695
          %v774 = vpow.pop %v773
          %v775 = vmul.f32 %v751, 1.442695
          %v776 = vpow.pop %v775
          %v777 = vmul.f32 %v752, 1.442695
          %v778 = vpow.pop %v777
          %v779 = vmul.f32 %v753, 1.442695
          %v780 = vpow.pop %v779
          %v781 = vmul.f32 %v754, 1.442695
          %v782 = vpow.pop %v781
          %v783 = vmul.f32 %v755, 1.442695
          %v784 = vpow.pop %v783
          %v785 = vmul.f32 %v756, 1.442695
          %v786 = vpow.pop %v785
          %v787 = vmul.f32 %v757, 1.442695
          %v788 = vpow.pop %v787
          %v789 = vmul.f32 %v758, 1.442695
          %v790 = vpow.pop %v789
          %791 = vadd.xlane.f32.xlu0 %v760
          %v792 = vpop.xlane.xlu0 %791
          %793 = vadd.xlane.f32.xlu0 %v762
          %v794 = vpop.xlane.xlu0 %793
          %795 = vadd.xlane.f32.xlu0 %v764
          %v796 = vpop.xlane.xlu0 %795
          %797 = vadd.xlane.f32.xlu0 %v766
          %v798 = vpop.xlane.xlu0 %797
          %799 = vadd.xlane.f32.xlu0 %v768
          %v800 = vpop.xlane.xlu0 %799
          %801 = vadd.xlane.f32.xlu0 %v770
          %v802 = vpop.xlane.xlu0 %801
          %803 = vadd.xlane.f32.xlu0 %v772
          %v804 = vpop.xlane.xlu0 %803
          %805 = vadd.xlane.f32.xlu0 %v774
          %v806 = vpop.xlane.xlu0 %805
          %807 = vadd.xlane.f32.xlu0 %v776
          %v808 = vpop.xlane.xlu0 %807
          %809 = vadd.xlane.f32.xlu0 %v778
          %v810 = vpop.xlane.xlu0 %809
          %811 = vadd.xlane.f32.xlu0 %v780
          %v812 = vpop.xlane.xlu0 %811
          %813 = vadd.xlane.f32.xlu0 %v782
          %v814 = vpop.xlane.xlu0 %813
          %815 = vadd.xlane.f32.xlu0 %v784
          %v816 = vpop.xlane.xlu0 %815
          %817 = vadd.xlane.f32.xlu0 %v786
          %v818 = vpop.xlane.xlu0 %817
          %819 = vadd.xlane.f32.xlu0 %v788
          %v820 = vpop.xlane.xlu0 %819
          %821 = vadd.xlane.f32.xlu0 %v790
          %v822 = vpop.xlane.xlu0 %821
          %v823 = vrcp.pop %v792
          %v824 = vrcp.pop %v794
          %v825 = vrcp.pop %v796
          %v826 = vrcp.pop %v798
          %v827 = vrcp.pop %v800
          %v828 = vrcp.pop %v802
          %v829 = vrcp.pop %v804
          %v830 = vrcp.pop %v806
          %v831 = vrcp.pop %v808
          %v832 = vrcp.pop %v810
          %v833 = vrcp.pop %v812
          %v834 = vrcp.pop %v814
          %v835 = vrcp.pop %v816
          %v836 = vrcp.pop %v818
          %v837 = vrcp.pop %v820
          %v838 = vrcp.pop %v822
          %v839 = vmul.f32 %v760, %v823
          %v840 = vmul.f32 %v762, %v824
          %v841 = vmul.f32 %v764, %v825
          %v842 = vmul.f32 %v766, %v826
          %v843 = vmul.f32 %v768, %v827
          %v844 = vmul.f32 %v770, %v828
          %v845 = vmul.f32 %v772, %v829
          %v846 = vmul.f32 %v774, %v830
          %v847 = vmul.f32 %v776, %v831
          %v848 = vmul.f32 %v778, %v832
          %v849 = vmul.f32 %v780, %v833
          %v850 = vmul.f32 %v782, %v834
          %v851 = vmul.f32 %v784, %v835
          %v852 = vmul.f32 %v786, %v836
          %v853 = vmul.f32 %v788, %v837
          %v854 = vmul.f32 %v790, %v838
          %855 = vst [vmem:[%s340] sm:$0xff] %v839
          %856 = vst [vmem:[%s340 + $0x8] sm:$0xff] %v840
          %857 = vst [vmem:[%s340 + $0x10] sm:$0xff] %v841
          %858 = vst [vmem:[%s340 + $0x18] sm:$0xff] %v842
          %859 = vst [vmem:[%s340 + $0x20] sm:$0xff] %v843
          %860 = vst [vmem:[%s340 + $0x28] sm:$0xff] %v844
          %861 = vst [vmem:[%s340 + $0x30] sm:$0xff] %v845
          %862 = vst [vmem:[%s340 + $0x38] sm:$0xff] %v846
          %863 = vst [vmem:[%s340 + $0x40] sm:$0xff] %v847
          %864 = vst [vmem:[%s340 + $0x48] sm:$0xff] %v848
          %865 = vst [vmem:[%s340 + $0x50] sm:$0xff] %v849
          %866 = vst [vmem:[%s340 + $0x58] sm:$0xff] %v850
          %867 = vst [vmem:[%s340 + $0x60] sm:$0xff] %v851
          %868 = vst [vmem:[%s340 + $0x68] sm:$0xff] %v852
          %869 = vst [vmem:[%s340 + $0x70] sm:$0xff] %v853
          %870 = vst [vmem:[%s340 + $0x78] sm:$0xff] %v854
        $region85: #{gcn_forward.3} parent=72 // pred_fallthru
          _
        %s871 = smul.u32 16, %s19
        %p872 = scmp.lt.s32.totalorder %s871, 31
        %s873 = scalar_select %p872, %s871, 31
        %s874 = smul.addr %s873, 8
        %s875 = scalar_lea.vmem %s4, %s874
        // Predicated region
        $region86: #{gcn_forward.3} parent=72 // pred_check
          %p876 = pneg %p141
        $region87: #{gcn_forward.3} parent=72 // pred_check_branch
          %878 = sbr.rel (%p876) target = $region89
        $region88: #{gcn_forward.3} parent=72 // pred_region
          %s879 = smul.u32 16, %s19
        $region89: #{gcn_forward.3} parent=72 // pred_fallthru
          _
      $region73: #{gcn_forward.3} parent=5 // pred_fallthru
        _
      %p880 = scmp.le.s32.totalorder 2, %s10
      // Predicated region
      $region90: #{gcn_forward.3} parent=5 // pred_check
        %p881 = pneg %p880
      $region91: #{gcn_forward.3} parent=5 // pred_check_branch
        %883 = sbr.rel (%p881) target = $region93
      $region92: #{gcn_forward.3} parent=5 // pred_region
        %s884 = ssub.s32 %s10, 2
        // Predicated region
        $region94: #{gcn_forward.3} parent=92 // pred_check
          %p885 = pneg %p147
        $region95: #{gcn_forward.3} parent=92 // pred_check_branch
          %887 = sbr.rel (%p885) target = $region97
        $region96: #{gcn_forward.3} parent=92 // pred_region
          %s888 = smul.u32 16, %s21
          %p889 = scmp.lt.s32.totalorder %s888, 31
          %s890 = scalar_select %p889, %s888, 31
          %s891 = smul.addr %s890, 8
          %s892 = scalar_lea.vmem %s4, %s891
        $region97: #{gcn_forward.3} parent=92 // pred_fallthru
          _
      $region93: #{gcn_forward.3} parent=5 // pred_fallthru
        _
    $region6: #{gcn_forward.3} parent=1 // loop_footer
      %s14 = sadd.s32 1, %s10
    $region7: #{gcn_forward.3} parent=1 // loop_footer_branch
      %9 = sbr.rel target = $region3
    $region8: #{gcn_forward.3} parent=1 // loop_exit
      _

</llo_original>
